<compile_context>
chip_gen: v7x
topology: tpu7x:2x2x1
jax: 0.10.0
libtpu: 0.0.40
codegen_flags: <defaults>
</compile_context>

<pallas_src>
import functools
import math

import numpy as np
import jax
import jax.numpy as jnp
from jax import lax
from jax.experimental import pallas as pl
from jax.experimental.pallas import tpu as pltpu

SAMPLING_STEP_SIZE = 0.2  # hard-coded in the pyronn CUDA launcher


def _fan_projection_kernel(params_ref, traj_x_ref, traj_y_ref, nchunks_ref,
                           vol_ref, sino_ref, *, s_batch, n_dtiles, vol_is_xy):
    """One (batch, projection-tile, detector-tile) triple per grid step.

    params_ref:  SMEM f32[9]  = [vol_origin_x, vol_origin_y, vol_spacing_x, vol_spacing_y,
                                 det_origin, det_spacing, sid, sdd, step_size]
    traj_x_ref:  SMEM f32[P]  central ray x components
    traj_y_ref:  SMEM f32[P]  central ray y components
    nchunks_ref: SMEM i32[P*n_dtiles]  per-(projection, det-tile) ray-march chunk counts
    vol_ref:     VMEM f32[H, W]   (or f32[W, H] when vol_is_xy) volume slice for this batch
    sino_ref:    VMEM f32[TP, TD] sinogram tile (TP projections x TD detector pixels)
    """
    TP, TD = sino_ref.shape
    if vol_is_xy:
        W, H = vol_ref.shape
    else:
        H, W = vol_ref.shape
    SD = s_batch * TD

    vox = params_ref[0]
    voy = params_ref[1]
    vsx = params_ref[2]
    vsy = params_ref[3]
    d_orig = params_ref[4]
    d_spac = params_ref[5]
    sid = params_ref[6]
    sdd = params_ref[7]
    step = params_ref[8]

    inv_vsx = 1.0 / vsx
    inv_vsy = 1.0 / vsy
    inv_step = 1.0 / step

    vol = vol_ref[...]  # (H, W) or (W, H)

    # ---- hoisted, loop-invariant constants -------------------------------------------------
    ix_col = lax.broadcasted_iota(jnp.int32, (W, 1), 0).astype(jnp.float32)   # (W, 1)
    iy_col = lax.broadcasted_iota(jnp.int32, (H, 1), 0).astype(jnp.float32)   # (H, 1)
    d_lane = lax.broadcasted_iota(jnp.int32, (1, TD), 1).astype(jnp.float32)  # (1, TD)

    dt = pl.program_id(2)
    det0 = (dt * TD).astype(jnp.float32)
    u_D = (d_lane + det0) * d_spac + d_orig                                   # (1, TD)

    # step-within-chunk index, laid out flat on the lane axis: [0]*TD, [1]*TD, ...
    s_flat = jnp.concatenate(
        [jnp.full((1, TD), float(g), jnp.float32) for g in range(s_batch)], axis=1)  # (1, SD)

    # volume AABB edges in physical coords (matches CUDA: index_to_physical(...) - 0.5)
    vol_min_x = vox - 0.5
    vol_max_x = W * vsx + vox - 0.5
    vol_min_y = voy - 0.5
    vol_max_y = H * vsy + voy - 0.5

    def bilinear_flat(fx, fy):
        # Bilinear "texture" fetch with border addressing, expressed as tent-weight matrices
        # contracted against the volume: one wide MXU matmul over the larger volume axis,
        # then a VALU multiply + sublane reduce over the smaller axis.
        wx = jnp.maximum(0.0, 1.0 - jnp.abs(ix_col - fx))                 # (W, N)
        wy = jnp.maximum(0.0, 1.0 - jnp.abs(iy_col - fy))                 # (H, N)
        if vol_is_xy:
            tmp = jnp.dot(vol, wy, preferred_element_type=jnp.float32)    # (W, N), MXU over H
            return jnp.sum(tmp * wx, axis=0, keepdims=True)               # (1, N)
        tmp = jnp.dot(vol, wx, preferred_element_type=jnp.float32)        # (H, N), MXU over W
        return jnp.sum(tmp * wy, axis=0, keepdims=True)                   # (1, N)

    def tile_s(v):  # (1, TD) -> (1, S*TD)
        return jnp.concatenate([v] * s_batch, axis=1)

    pt = pl.program_id(1)
    p_base = pt * TP

    @pl.loop(0, TP)
    def _proj(p_local):
        p = p_base + p_local
        cr_x = traj_x_ref[p]
        cr_y = traj_y_ref[p]

        src_x = cr_x * (-sid)
        src_y = cr_y * (-sid)

        # ray direction per detector pixel; detector axis u_vec = (-cr_y, cr_x)
        rx = cr_x * sdd - cr_y * u_D           # (1, TD)  == det_x - src_x
        ry = cr_y * sdd + cr_x * u_D           # (1, TD)  == det_y - src_y
        inv_n = lax.rsqrt(rx * rx + ry * ry)
        rx = rx * inv_n
        ry = ry * inv_n

        # slab (AABB) intersection
        min_a = jnp.zeros((1, TD), jnp.float32)
        max_a = jnp.full((1, TD), jnp.inf, dtype=jnp.float32)

        hit_x = rx != 0.0
        recx = 1.0 / rx
        ax0 = (vol_min_x - src_x) * recx
        ax1 = (vol_max_x - src_x) * recx
        min_a = jnp.where(hit_x, jnp.minimum(ax0, ax1), min_a)
        max_a = jnp.where(hit_x, jnp.maximum(ax0, ax1), max_a)

        hit_y = ry != 0.0
        recy = 1.0 / ry
        ay0 = (vol_min_y - src_y) * recy
        ay1 = (vol_max_y - src_y) * recy
        min_a = jnp.where(hit_y, jnp.maximum(min_a, jnp.minimum(ay0, ay1)), min_a)
        max_a = jnp.where(hit_y, jnp.minimum(max_a, jnp.maximum(ay0, ay1)), max_a)

        # sample k (k = 0, 1, ...) lies at alpha = a0 + k*step; k=0 is the half-weighted entry
        a0 = min_a + 0.5 * step
        t = (max_a - a0) * inv_step
        n_valid = jnp.maximum(0.0, jnp.ceil(t))          # number of samples with alpha < max_a

        # fractional volume indices of sample 0 and per-step increments
        fx0 = (src_x + a0 * rx - vox) * inv_vsx
        fy0 = (src_y + a0 * ry - voy) * inv_vsy
        dfx = (step * inv_vsx) * rx
        dfy = (step * inv_vsy) * ry

        # tiled (1, S*TD) copies for the step-batched chunk loop
        fx0_S = tile_s(fx0)
        fy0_S = tile_s(fy0)
        dfx_S = tile_s(dfx)
        dfy_S = tile_s(dfy)
        nv_S = tile_s(n_valid)

        nc = nchunks_ref[p * n_dtiles + dt]  # host-precomputed per-(proj, det-tile) chunk bound

        def chunk_body(c, acc):
            kf = s_flat + (c * s_batch).astype(jnp.float32)    # global sample index per column
            valid = kf < nv_S
            # fold the mask into fx: out-of-range sentinel -> all-zero tent weights -> value 0
            fx = jnp.where(valid, fx0_S + kf * dfx_S, -2.0)
            fy = fy0_S + kf * dfy_S
            return acc + bilinear_flat(fx, fy)                 # (1, S*TD)

        acc = lax.fori_loop(0, nc, chunk_body, jnp.zeros((1, SD), jnp.float32))

        # reduce the S step-groups -> per-detector accumulated sum (all samples, unit weight)
        pixel = acc[:, 0:TD]
        for g in range(1, s_batch):
            pixel = pixel + acc[:, g * TD:(g + 1) * TD]

        # analytic last-sample position
        k_last = n_valid - 1.0
        last_step = max_a - (a0 + k_last * step)               # in (0, step] when samples exist

        # entry / last / exit samples in one batched (1, 3*TD) bilinear fetch
        fx_e = jnp.where(n_valid > 0.0, fx0, -2.0)             # entry masked if no samples
        fx_l = fx0 + k_last * dfx
        fy_l = fy0 + k_last * dfy
        fx_x = fx0 + t * dfx                                   # alpha = max_a (exit point)
        fy_x = fy0 + t * dfy
        fx3 = jnp.concatenate([fx_e, fx_l, fx_x], axis=1)
        fy3 = jnp.concatenate([fy0, fy_l, fy_x], axis=1)
        v3 = bilinear_flat(fx3, fy3)
        v_entry = v3[:, 0:TD]
        v_last = v3[:, TD:2 * TD]
        v_exit = v3[:, 2 * TD:3 * TD]

        # trapezoidal rule: entry sample gets half weight, then scale by step
        pixel = (pixel - 0.5 * v_entry) * step

        # exit correction (only where the ray accumulated something, matching `pixel > 0`)
        has_mass = pixel > 0.0
        tail = 0.5 * (last_step - step) * v_last + 0.5 * last_step * v_exit
        pixel = pixel + jnp.where(has_mass, tail, 0.0)

        # normalize to world units
        pixel = pixel * jnp.sqrt((rx * vsx) * (rx * vsx) + (ry * vsy) * (ry * vsy))

        sino_ref[pl.ds(p_local, 1), :] = pixel


def fan_projection_2d(volume,
                      sinogram_shape,
                      volume_origin,
                      detector_origin,
                      volume_spacing,
                      detector_spacing,
                      source_isocenter_distance,
                      source_detector_distance,
                      trajectory,
                      s_batch=8):
    """Mirror of FanProjection2D.forward. Geometry vectors use pyronn's numpy (y, x) order."""
    volume = jnp.asarray(volume, jnp.float32)
    B, H, W = volume.shape
    sino_shape = np.asarray(sinogram_shape).reshape(-1)
    n_proj, n_det = int(sino_shape[0]), int(sino_shape[1])

    voy, vox = [float(v) for v in np.asarray(volume_origin).reshape(-1)[:2]]
    vsy, vsx = [float(v) for v in np.asarray(volume_spacing).reshape(-1)[:2]]
    d_orig = float(np.asarray(detector_origin).reshape(-1)[0])
    d_spac = float(np.asarray(detector_spacing).reshape(-1)[0])
    sid = float(np.asarray(source_isocenter_distance).reshape(-1)[0])
    sdd = float(np.asarray(source_detector_distance).reshape(-1)[0])

    step = SAMPLING_STEP_SIZE * min(vsx, vsy)
    diag = math.sqrt((W * vsx) ** 2 + (H * vsy) ** 2)

    # ---- detector tiling: dense 128-lane blocks when possible ------------------------------
    if n_det % 128 == 0 and n_det > 128:
        td = 256 if n_det % 256 == 0 else 128
    else:
        td = n_det
    n_dtiles = n_det // td

    # ---- projection tiling: dense (tp, td) output blocks ------------------------------------
    tp = 8 if (n_proj % 8 == 0) else n_proj
    n_ptiles = n_proj // tp

    # ---- MXU contracts the larger volume axis (transpose in the wrapper, free via XLA) ------
    vol_is_xy = H > W
    vol_in = jnp.swapaxes(volume, 1, 2) if vol_is_xy else volume

    # ---- s_batch: keep the per-chunk (W/H, S*TD) weight intermediates comfortably in VMEM ---
    budget_bytes = 6 * 1024 * 1024
    per_s_bytes = (W + H + 2 * min(H, W)) * td * 4
    s_batch = int(max(1, min(s_batch, budget_bytes // max(per_s_bytes, 1))))

    traj_np = np.asarray(trajectory, np.float64).reshape(n_proj, 2)

    # ---- host-side per-(projection, det-tile) ray-march chunk bound (mirrors kernel slab) ---
    worst_samples = int(math.ceil(diag / step)) + 2
    d_idx = np.arange(n_det, dtype=np.float64)
    u_np = d_idx * d_spac + d_orig                                    # (D,)
    crx = traj_np[:, 0:1]
    cry = traj_np[:, 1:2]
    srcx = -sid * crx
    srcy = -sid * cry
    with np.errstate(divide="ignore", invalid="ignore"):
        rxn = crx * sdd - cry * u_np                                  # (P, D)
        ryn = cry * sdd + crx * u_np
        nrm = np.sqrt(rxn * rxn + ryn * ryn)
        rxn = rxn / nrm
        ryn = ryn / nrm
        min_a = np.zeros_like(rxn)
        max_a = np.full_like(rxn, np.inf)
        vminx, vmaxx = vox - 0.5, W * vsx + vox - 0.5
        vminy, vmaxy = voy - 0.5, H * vsy + voy - 0.5
        hx = rxn != 0.0
        ax0 = (vminx - srcx) / rxn
        ax1 = (vmaxx - srcx) / rxn
        min_a = np.where(hx, np.minimum(ax0, ax1), min_a)
        max_a = np.where(hx, np.maximum(ax0, ax1), max_a)
        hy = ryn != 0.0
        ay0 = (vminy - srcy) / ryn
        ay1 = (vmaxy - srcy) / ryn
        min_a = np.where(hy, np.maximum(min_a, np.minimum(ay0, ay1)), min_a)
        max_a = np.where(hy, np.minimum(max_a, np.maximum(ay0, ay1)), max_a)
        n_valid = np.maximum(0.0, np.ceil((max_a - (min_a + 0.5 * step)) / step))
    n_valid = np.where(np.isfinite(n_valid), n_valid, float(worst_samples))
    nv_tile = n_valid.reshape(n_proj, n_dtiles, td).max(axis=2)       # (P, n_dtiles)
    worst_chunks = float(int(math.ceil(worst_samples / s_batch)) + 1)
    n_chunks_host = np.ceil(nv_tile / s_batch) + 1.0                  # +1 chunk f32 margin
    n_chunks_host = np.clip(n_chunks_host, 1.0, worst_chunks).astype(np.int32)

    params = jnp.asarray(
        [vox, voy, vsx, vsy, d_orig, d_spac, sid, sdd, step], dtype=jnp.float32)
    traj_x = jnp.asarray(traj_np[:, 0], jnp.float32)
    traj_y = jnp.asarray(traj_np[:, 1], jnp.float32)
    nchunks = jnp.asarray(n_chunks_host.reshape(-1), jnp.int32)       # flat 1D -> tiny SMEM pad

    kernel = functools.partial(_fan_projection_kernel, s_batch=s_batch,
                               n_dtiles=n_dtiles, vol_is_xy=vol_is_xy)

    vol_block = (None, W, H) if vol_is_xy else (None, H, W)

    return pl.pallas_call(
        kernel,
        out_shape=jax.ShapeDtypeStruct((B, n_proj, n_det), jnp.float32),
        grid=(B, n_ptiles, n_dtiles),
        in_specs=[
            pl.BlockSpec(memory_space=pltpu.MemorySpace.SMEM),        # params
            pl.BlockSpec(memory_space=pltpu.MemorySpace.SMEM),        # traj_x
            pl.BlockSpec(memory_space=pltpu.MemorySpace.SMEM),        # traj_y
            pl.BlockSpec(memory_space=pltpu.MemorySpace.SMEM),        # per-(proj, tile) chunks
            pl.BlockSpec(vol_block, lambda b, pt, dt: (b, 0, 0)),     # volume slice per batch
        ],
        out_specs=pl.BlockSpec((None, tp, td), lambda b, pt, dt: (b, pt, dt)),
        compiler_params=pltpu.CompilerParams(
            dimension_semantics=("parallel", "parallel", "parallel")),
    )(params, traj_x, traj_y, nchunks, vol_in)


if __name__ == "__main__":
    key = jax.random.PRNGKey(0)

    B, H, W = 2, 32, 32          # volume: (batch, y, x)
    n_proj, n_det = 8, 128       # sinogram: (batch, projections, detector pixels)

    volume = jax.random.uniform(key, (B, H, W), dtype=jnp.float32)

    vsy = vsx = 1.0
    det_spacing = 0.75
    sid, sdd = 100.0, 200.0

    volume_origin = np.array([-(H - 1) / 2.0 * vsy, -(W - 1) / 2.0 * vsx], np.float32)
    detector_origin = np.array([-(n_det - 1) / 2.0 * det_spacing], np.float32)
    angles = np.linspace(0.0, 2.0 * np.pi, n_proj, endpoint=False)
    trajectory = np.stack([np.cos(angles), np.sin(angles)], axis=-1).astype(np.float32)

    geometry = dict(
        sinogram_shape=np.array([n_proj, n_det], np.int32),
        volume_origin=volume_origin,
        detector_origin=detector_origin,
        volume_spacing=np.array([vsy, vsx], np.float32),
        detector_spacing=np.array([det_spacing], np.float32),
        source_isocenter_distance=np.array([sid], np.float32),
        source_detector_distance=np.array([sdd], np.float32),
        trajectory=trajectory,
    )

    sino = fan_projection_2d(volume, **geometry)
    sino = jax.block_until_ready(sino)

    assert sino.shape == (B, n_proj, n_det), sino.shape
    assert sino.dtype == jnp.float32, sino.dtype
    assert bool(jnp.all(jnp.isfinite(sino)))
    assert bool(jnp.any(sino != 0.0))
    print("KERNEL_OK")
</pallas_src>

<mosaic_0001>
module attributes {stable_mosaic.version = 11 : i64} {
  func.func @_fan_projection_kernel(%arg0: i32, %arg1: i32, %arg2: i32, %arg3: memref<9xf32, #tpu.memory_space<smem>>, %arg4: memref<8xf32, #tpu.memory_space<smem>>, %arg5: memref<8xf32, #tpu.memory_space<smem>>, %arg6: memref<8xi32, #tpu.memory_space<smem>>, %arg7: memref<1x32x32xf32, #tpu.memory_space<vmem>>, %arg8: memref<1x8x128xf32, #tpu.memory_space<vmem>>) attributes {dimension_semantics = [#tpu.dimension_semantics<parallel>, #tpu.dimension_semantics<parallel>, #tpu.dimension_semantics<parallel>], iteration_bounds = array<i64: 2, 1, 1>, scalar_prefetch = 0 : i64, scratch_operands = 0 : i64, tpu.core_type = #tpu.core_type<tc>, window_params = [{transform_indices = @transform_0, window_bounds = array<i64: 9>}, {transform_indices = @transform_1, window_bounds = array<i64: 8>}, {transform_indices = @transform_2, window_bounds = array<i64: 8>}, {transform_indices = @transform_3, window_bounds = array<i64: 8>}, {transform_indices = @transform_4, window_bounds = array<i64: 1, 32, 32>}, {transform_indices = @transform_5, window_bounds = array<i64: 1, 8, 128>}]} {
    %c0 = arith.constant 0 : index
    %0 = memref.load %arg3[%c0] : memref<9xf32, #tpu.memory_space<smem>>
    %c1 = arith.constant 1 : index
    %1 = memref.load %arg3[%c1] : memref<9xf32, #tpu.memory_space<smem>>
    %c2 = arith.constant 2 : index
    %2 = memref.load %arg3[%c2] : memref<9xf32, #tpu.memory_space<smem>>
    %c3 = arith.constant 3 : index
    %3 = memref.load %arg3[%c3] : memref<9xf32, #tpu.memory_space<smem>>
    %c4 = arith.constant 4 : index
    %4 = memref.load %arg3[%c4] : memref<9xf32, #tpu.memory_space<smem>>
    %c5 = arith.constant 5 : index
    %5 = memref.load %arg3[%c5] : memref<9xf32, #tpu.memory_space<smem>>
    %c6 = arith.constant 6 : index
    %6 = memref.load %arg3[%c6] : memref<9xf32, #tpu.memory_space<smem>>
    %c7 = arith.constant 7 : index
    %7 = memref.load %arg3[%c7] : memref<9xf32, #tpu.memory_space<smem>>
    %c8 = arith.constant 8 : index
    %8 = memref.load %arg3[%c8] : memref<9xf32, #tpu.memory_space<smem>>
    %cst = arith.constant 1.000000e+00 : f32
    %9 = arith.divf %cst, %2 : f32
    %cst_0 = arith.constant 1.000000e+00 : f32
    %10 = arith.divf %cst_0, %3 : f32
    %cst_1 = arith.constant 1.000000e+00 : f32
    %11 = arith.divf %cst_1, %8 : f32
    %c0_2 = arith.constant 0 : index
    %c0_3 = arith.constant 0 : index
    %c0_4 = arith.constant 0 : index
    %12 = vector.load %arg7[%c0_2, %c0_3, %c0_4] : memref<1x32x32xf32, #tpu.memory_space<vmem>>, vector<1x32x32xf32>
    %13 = vector.shape_cast %12 : vector<1x32x32xf32> to vector<32x32xf32>
    %14 = tpu.iota {dimensions = array<i32: 0>} : vector<32x1xi32>
    %15 = arith.sitofp %14 : vector<32x1xi32> to vector<32x1xf32>
    %16 = tpu.iota {dimensions = array<i32: 0>} : vector<32x1xi32>
    %17 = arith.sitofp %16 : vector<32x1xi32> to vector<32x1xf32>
    %18 = tpu.iota {dimensions = array<i32: 1>} : vector<1x128xi32>
    %19 = arith.sitofp %18 : vector<1x128xi32> to vector<1x128xf32>
    %c128_i32 = arith.constant 128 : i32
    %20 = arith.muli %arg2, %c128_i32 : i32
    %21 = arith.sitofp %20 : i32 to f32
    %22 = vector.broadcast %21 : f32 to vector<1x128xf32>
    %23 = arith.addf %19, %22 : vector<1x128xf32>
    %24 = vector.broadcast %5 : f32 to vector<1x128xf32>
    %25 = arith.mulf %23, %24 : vector<1x128xf32>
    %26 = vector.broadcast %4 : f32 to vector<1x128xf32>
    %27 = arith.addf %25, %26 : vector<1x128xf32>
    %cst_5 = arith.constant 0.000000e+00 : f32
    %28 = vector.broadcast %cst_5 : f32 to vector<1x128xf32>
    %cst_6 = arith.constant 1.000000e+00 : f32
    %29 = vector.broadcast %cst_6 : f32 to vector<1x128xf32>
    %cst_7 = arith.constant 2.000000e+00 : f32
    %30 = vector.broadcast %cst_7 : f32 to vector<1x128xf32>
    %cst_8 = arith.constant 3.000000e+00 : f32
    %31 = vector.broadcast %cst_8 : f32 to vector<1x128xf32>
    %cst_9 = arith.constant 4.000000e+00 : f32
    %32 = vector.broadcast %cst_9 : f32 to vector<1x128xf32>
    %cst_10 = arith.constant 5.000000e+00 : f32
    %33 = vector.broadcast %cst_10 : f32 to vector<1x128xf32>
    %cst_11 = arith.constant 6.000000e+00 : f32
    %34 = vector.broadcast %cst_11 : f32 to vector<1x128xf32>
    %cst_12 = arith.constant 7.000000e+00 : f32
    %35 = vector.broadcast %cst_12 : f32 to vector<1x128xf32>
    %36 = tpu.concatenate %28, %29, %30, %31, %32, %33, %34, %35 in 1 : vector<1x128xf32>, vector<1x128xf32>, vector<1x128xf32>, vector<1x128xf32>, vector<1x128xf32>, vector<1x128xf32>, vector<1x128xf32>, vector<1x128xf32> -> vector<1x1024xf32>
    %cst_13 = arith.constant 5.000000e-01 : f32
    %37 = arith.subf %0, %cst_13 : f32
    %cst_14 = arith.constant 3.200000e+01 : f32
    %38 = arith.mulf %cst_14, %2 : f32
    %39 = arith.addf %38, %0 : f32
    %cst_15 = arith.constant 5.000000e-01 : f32
    %40 = arith.subf %39, %cst_15 : f32
    %cst_16 = arith.constant 5.000000e-01 : f32
    %41 = arith.subf %1, %cst_16 : f32
    %cst_17 = arith.constant 3.200000e+01 : f32
    %42 = arith.mulf %cst_17, %3 : f32
    %43 = arith.addf %42, %1 : f32
    %cst_18 = arith.constant 5.000000e-01 : f32
    %44 = arith.subf %43, %cst_18 : f32
    %c8_i32 = arith.constant 8 : i32
    %45 = arith.muli %arg1, %c8_i32 : i32
    %c0_i32 = arith.constant 0 : i32
    %c8_i32_19 = arith.constant 8 : i32
    %46 = arith.addi %c0_i32, %c8_i32_19 : i32
    %c1_i32 = arith.constant 1 : i32
    scf.for %arg9 = %c0_i32 to %46 step %c1_i32  : i32 {
      %c1_i32_21 = arith.constant 1 : i32
      %47 = arith.muli %arg9, %c1_i32_21 : i32
      %c0_i32_22 = arith.constant 0 : i32
      %48 = arith.addi %c0_i32_22, %47 : i32
      %49 = arith.addi %45, %48 : i32
      %50 = arith.index_cast %49 : i32 to index
      %51 = memref.load %arg4[%50] : memref<8xf32, #tpu.memory_space<smem>>
      %52 = arith.index_cast %49 : i32 to index
      %53 = memref.load %arg5[%52] : memref<8xf32, #tpu.memory_space<smem>>
      %cst_23 = arith.constant 0.000000e+00 : f32
      %54 = arith.subf %cst_23, %6 : f32
      %55 = arith.mulf %51, %54 : f32
      %cst_24 = arith.constant 0.000000e+00 : f32
      %56 = arith.subf %cst_24, %6 : f32
      %57 = arith.mulf %53, %56 : f32
      %58 = arith.mulf %51, %7 : f32
      %59 = vector.broadcast %53 : f32 to vector<1x128xf32>
      %60 = arith.mulf %59, %27 : vector<1x128xf32>
      %61 = vector.broadcast %58 : f32 to vector<1x128xf32>
      %62 = arith.subf %61, %60 : vector<1x128xf32>
      %63 = arith.mulf %53, %7 : f32
      %64 = vector.broadcast %51 : f32 to vector<1x128xf32>
      %65 = arith.mulf %64, %27 : vector<1x128xf32>
      %66 = vector.broadcast %63 : f32 to vector<1x128xf32>
      %67 = arith.addf %66, %65 : vector<1x128xf32>
      %68 = arith.mulf %62, %62 : vector<1x128xf32>
      %69 = arith.mulf %67, %67 : vector<1x128xf32>
      %70 = arith.addf %68, %69 : vector<1x128xf32>
      %71 = math.rsqrt %70 : vector<1x128xf32>
      %72 = arith.mulf %62, %71 : vector<1x128xf32>
      %73 = arith.mulf %67, %71 : vector<1x128xf32>
      %cst_25 = arith.constant 0.000000e+00 : f32
      %74 = vector.broadcast %cst_25 : f32 to vector<1x128xf32>
      %cst_26 = arith.constant 0x7F800000 : f32
      %75 = vector.broadcast %cst_26 : f32 to vector<1x128xf32>
      %cst_27 = arith.constant 0.000000e+00 : f32
      %76 = vector.broadcast %cst_27 : f32 to vector<1x128xf32>
      %77 = arith.cmpf one, %72, %76 : vector<1x128xf32>
      %cst_28 = arith.constant 1.000000e+00 : f32
      %78 = vector.broadcast %cst_28 : f32 to vector<1x128xf32>
      %79 = arith.divf %78, %72 : vector<1x128xf32>
      %80 = arith.subf %37, %55 : f32
      %81 = vector.broadcast %80 : f32 to vector<1x128xf32>
      %82 = arith.mulf %81, %79 : vector<1x128xf32>
      %83 = arith.subf %40, %55 : f32
      %84 = vector.broadcast %83 : f32 to vector<1x128xf32>
      %85 = arith.mulf %84, %79 : vector<1x128xf32>
      %86 = arith.minimumf %82, %85 : vector<1x128xf32>
      %87 = arith.select %77, %86, %74 : vector<1x128xi1>, vector<1x128xf32>
      %88 = arith.maximumf %82, %85 : vector<1x128xf32>
      %89 = arith.select %77, %88, %75 : vector<1x128xi1>, vector<1x128xf32>
      %cst_29 = arith.constant 0.000000e+00 : f32
      %90 = vector.broadcast %cst_29 : f32 to vector<1x128xf32>
      %91 = arith.cmpf one, %73, %90 : vector<1x128xf32>
      %cst_30 = arith.constant 1.000000e+00 : f32
      %92 = vector.broadcast %cst_30 : f32 to vector<1x128xf32>
      %93 = arith.divf %92, %73 : vector<1x128xf32>
      %94 = arith.subf %41, %57 : f32
      %95 = vector.broadcast %94 : f32 to vector<1x128xf32>
      %96 = arith.mulf %95, %93 : vector<1x128xf32>
      %97 = arith.subf %44, %57 : f32
      %98 = vector.broadcast %97 : f32 to vector<1x128xf32>
      %99 = arith.mulf %98, %93 : vector<1x128xf32>
      %100 = arith.minimumf %96, %99 : vector<1x128xf32>
      %101 = arith.maximumf %87, %100 : vector<1x128xf32>
      %102 = arith.select %91, %101, %87 : vector<1x128xi1>, vector<1x128xf32>
      %103 = arith.maximumf %96, %99 : vector<1x128xf32>
      %104 = arith.minimumf %89, %103 : vector<1x128xf32>
      %105 = arith.select %91, %104, %89 : vector<1x128xi1>, vector<1x128xf32>
      %cst_31 = arith.constant 5.000000e-01 : f32
      %106 = arith.mulf %cst_31, %8 : f32
      %107 = vector.broadcast %106 : f32 to vector<1x128xf32>
      %108 = arith.addf %102, %107 : vector<1x128xf32>
      %109 = arith.subf %105, %108 : vector<1x128xf32>
      %110 = vector.broadcast %11 : f32 to vector<1x128xf32>
      %111 = arith.mulf %109, %110 : vector<1x128xf32>
      %112 = math.ceil %111 : vector<1x128xf32>
      %cst_32 = arith.constant 0.000000e+00 : f32
      %113 = vector.broadcast %cst_32 : f32 to vector<1x128xf32>
      %114 = arith.maximumf %113, %112 : vector<1x128xf32>
      %115 = arith.mulf %108, %72 : vector<1x128xf32>
      %116 = vector.broadcast %55 : f32 to vector<1x128xf32>
      %117 = arith.addf %116, %115 : vector<1x128xf32>
      %118 = vector.broadcast %0 : f32 to vector<1x128xf32>
      %119 = arith.subf %117, %118 : vector<1x128xf32>
      %120 = vector.broadcast %9 : f32 to vector<1x128xf32>
      %121 = arith.mulf %119, %120 : vector<1x128xf32>
      %122 = arith.mulf %108, %73 : vector<1x128xf32>
      %123 = vector.broadcast %57 : f32 to vector<1x128xf32>
      %124 = arith.addf %123, %122 : vector<1x128xf32>
      %125 = vector.broadcast %1 : f32 to vector<1x128xf32>
      %126 = arith.subf %124, %125 : vector<1x128xf32>
      %127 = vector.broadcast %10 : f32 to vector<1x128xf32>
      %128 = arith.mulf %126, %127 : vector<1x128xf32>
      %129 = arith.mulf %8, %9 : f32
      %130 = vector.broadcast %129 : f32 to vector<1x128xf32>
      %131 = arith.mulf %130, %72 : vector<1x128xf32>
      %132 = arith.mulf %8, %10 : f32
      %133 = vector.broadcast %132 : f32 to vector<1x128xf32>
      %134 = arith.mulf %133, %73 : vector<1x128xf32>
      %135 = tpu.concatenate %121, %121, %121, %121, %121, %121, %121, %121 in 1 : vector<1x128xf32>, vector<1x128xf32>, vector<1x128xf32>, vector<1x128xf32>, vector<1x128xf32>, vector<1x128xf32>, vector<1x128xf32>, vector<1x128xf32> -> vector<1x1024xf32>
      %136 = tpu.concatenate %128, %128, %128, %128, %128, %128, %128, %128 in 1 : vector<1x128xf32>, vector<1x128xf32>, vector<1x128xf32>, vector<1x128xf32>, vector<1x128xf32>, vector<1x128xf32>, vector<1x128xf32>, vector<1x128xf32> -> vector<1x1024xf32>
      %137 = tpu.concatenate %131, %131, %131, %131, %131, %131, %131, %131 in 1 : vector<1x128xf32>, vector<1x128xf32>, vector<1x128xf32>, vector<1x128xf32>, vector<1x128xf32>, vector<1x128xf32>, vector<1x128xf32>, vector<1x128xf32> -> vector<1x1024xf32>
      %138 = tpu.concatenate %134, %134, %134, %134, %134, %134, %134, %134 in 1 : vector<1x128xf32>, vector<1x128xf32>, vector<1x128xf32>, vector<1x128xf32>, vector<1x128xf32>, vector<1x128xf32>, vector<1x128xf32>, vector<1x128xf32> -> vector<1x1024xf32>
      %139 = tpu.concatenate %114, %114, %114, %114, %114, %114, %114, %114 in 1 : vector<1x128xf32>, vector<1x128xf32>, vector<1x128xf32>, vector<1x128xf32>, vector<1x128xf32>, vector<1x128xf32>, vector<1x128xf32>, vector<1x128xf32> -> vector<1x1024xf32>
      %c1_i32_33 = arith.constant 1 : i32
      %140 = arith.muli %49, %c1_i32_33 : i32
      %141 = arith.addi %140, %arg2 : i32
      %142 = arith.index_cast %141 : i32 to index
      %143 = memref.load %arg6[%142] : memref<8xi32, #tpu.memory_space<smem>>
      %cst_34 = arith.constant 0.000000e+00 : f32
      %144 = vector.broadcast %cst_34 : f32 to vector<1x1024xf32>
      %c0_i32_35 = arith.constant 0 : i32
      %145 = arith.subi %143, %c0_i32_35 : i32
      %146 = arith.addi %c0_i32_35, %145 : i32
      %c1_i32_36 = arith.constant 1 : i32
      %147 = scf.for %arg10 = %c0_i32_35 to %146 step %c1_i32_36 iter_args(%arg11 = %144) -> (vector<1x1024xf32>)  : i32 {
        %c8_i32_53 = arith.constant 8 : i32
        %242 = arith.muli %arg10, %c8_i32_53 : i32
        %243 = arith.sitofp %242 : i32 to f32
        %244 = vector.broadcast %243 : f32 to vector<1x1024xf32>
        %245 = arith.addf %36, %244 : vector<1x1024xf32>
        %246 = arith.cmpf olt, %245, %139 : vector<1x1024xf32>
        %247 = arith.mulf %245, %137 : vector<1x1024xf32>
        %248 = arith.addf %135, %247 : vector<1x1024xf32>
        %cst_54 = arith.constant -2.000000e+00 : f32
        %249 = vector.broadcast %cst_54 : f32 to vector<1x1024xf32>
        %250 = arith.select %246, %248, %249 : vector<1x1024xi1>, vector<1x1024xf32>
        %251 = arith.mulf %245, %138 : vector<1x1024xf32>
        %252 = arith.addf %136, %251 : vector<1x1024xf32>
        %253 = vector.broadcast %15 : vector<32x1xf32> to vector<32x1024xf32>
        %254 = vector.broadcast %250 : vector<1x1024xf32> to vector<32x1024xf32>
        %255 = arith.subf %253, %254 : vector<32x1024xf32>
        %256 = math.absf %255 : vector<32x1024xf32>
        %cst_55 = arith.constant 1.000000e+00 : f32
        %257 = vector.broadcast %cst_55 : f32 to vector<32x1024xf32>
        %258 = arith.subf %257, %256 : vector<32x1024xf32>
        %cst_56 = arith.constant 0.000000e+00 : f32
        %259 = vector.broadcast %cst_56 : f32 to vector<32x1024xf32>
        %260 = arith.maximumf %259, %258 : vector<32x1024xf32>
        %261 = vector.broadcast %17 : vector<32x1xf32> to vector<32x1024xf32>
        %262 = vector.broadcast %252 : vector<1x1024xf32> to vector<32x1024xf32>
        %263 = arith.subf %261, %262 : vector<32x1024xf32>
        %264 = math.absf %263 : vector<32x1024xf32>
        %cst_57 = arith.constant 1.000000e+00 : f32
        %265 = vector.broadcast %cst_57 : f32 to vector<32x1024xf32>
        %266 = arith.subf %265, %264 : vector<32x1024xf32>
        %cst_58 = arith.constant 0.000000e+00 : f32
        %267 = vector.broadcast %cst_58 : f32 to vector<32x1024xf32>
        %268 = arith.maximumf %267, %266 : vector<32x1024xf32>
        %cst_59 = arith.constant dense<0.000000e+00> : vector<32x1024xf32>
        %269 = tpu.matmul %13, %260, %cst_59 {dimension_numbers = #tpu.dot_dimension_numbers<[1], [0], [0], [1], [0, 0, 1, 1], [], []>} : vector<32x32xf32>, vector<32x1024xf32>, vector<32x1024xf32> -> vector<32x1024xf32>
        %270 = arith.mulf %269, %268 : vector<32x1024xf32>
        %cst_60 = arith.constant dense<0.000000e+00> : vector<1024xf32>
        %271 = vector.multi_reduction <add>, %270, %cst_60 [0] : vector<32x1024xf32> to vector<1024xf32>
        %272 = vector.shape_cast %271 : vector<1024xf32> to vector<1x1024xf32>
        %273 = arith.addf %arg11, %272 : vector<1x1024xf32>
        scf.yield %273 : vector<1x1024xf32>
      }
      %148 = vector.extract_strided_slice %147 {offsets = [0, 0], sizes = [1, 128], strides = [1, 1]} : vector<1x1024xf32> to vector<1x128xf32>
      %149 = vector.extract_strided_slice %147 {offsets = [0, 128], sizes = [1, 128], strides = [1, 1]} : vector<1x1024xf32> to vector<1x128xf32>
      %150 = arith.addf %148, %149 : vector<1x128xf32>
      %151 = vector.extract_strided_slice %147 {offsets = [0, 256], sizes = [1, 128], strides = [1, 1]} : vector<1x1024xf32> to vector<1x128xf32>
      %152 = arith.addf %150, %151 : vector<1x128xf32>
      %153 = vector.extract_strided_slice %147 {offsets = [0, 384], sizes = [1, 128], strides = [1, 1]} : vector<1x1024xf32> to vector<1x128xf32>
      %154 = arith.addf %152, %153 : vector<1x128xf32>
      %155 = vector.extract_strided_slice %147 {offsets = [0, 512], sizes = [1, 128], strides = [1, 1]} : vector<1x1024xf32> to vector<1x128xf32>
      %156 = arith.addf %154, %155 : vector<1x128xf32>
      %157 = vector.extract_strided_slice %147 {offsets = [0, 640], sizes = [1, 128], strides = [1, 1]} : vector<1x1024xf32> to vector<1x128xf32>
      %158 = arith.addf %156, %157 : vector<1x128xf32>
      %159 = vector.extract_strided_slice %147 {offsets = [0, 768], sizes = [1, 128], strides = [1, 1]} : vector<1x1024xf32> to vector<1x128xf32>
      %160 = arith.addf %158, %159 : vector<1x128xf32>
      %161 = vector.extract_strided_slice %147 {offsets = [0, 896], sizes = [1, 128], strides = [1, 1]} : vector<1x1024xf32> to vector<1x128xf32>
      %162 = arith.addf %160, %161 : vector<1x128xf32>
      %cst_37 = arith.constant 1.000000e+00 : f32
      %163 = vector.broadcast %cst_37 : f32 to vector<1x128xf32>
      %164 = arith.subf %114, %163 : vector<1x128xf32>
      %165 = vector.broadcast %8 : f32 to vector<1x128xf32>
      %166 = arith.mulf %164, %165 : vector<1x128xf32>
      %167 = arith.addf %108, %166 : vector<1x128xf32>
      %168 = arith.subf %105, %167 : vector<1x128xf32>
      %cst_38 = arith.constant 0.000000e+00 : f32
      %169 = vector.broadcast %cst_38 : f32 to vector<1x128xf32>
      %170 = arith.cmpf ogt, %114, %169 : vector<1x128xf32>
      %cst_39 = arith.constant -2.000000e+00 : f32
      %171 = vector.broadcast %cst_39 : f32 to vector<1x128xf32>
      %172 = arith.select %170, %121, %171 : vector<1x128xi1>, vector<1x128xf32>
      %173 = arith.mulf %164, %131 : vector<1x128xf32>
      %174 = arith.addf %121, %173 : vector<1x128xf32>
      %175 = arith.mulf %164, %134 : vector<1x128xf32>
      %176 = arith.addf %128, %175 : vector<1x128xf32>
      %177 = arith.mulf %111, %131 : vector<1x128xf32>
      %178 = arith.addf %121, %177 : vector<1x128xf32>
      %179 = arith.mulf %111, %134 : vector<1x128xf32>
      %180 = arith.addf %128, %179 : vector<1x128xf32>
      %181 = tpu.concatenate %172, %174, %178 in 1 : vector<1x128xf32>, vector<1x128xf32>, vector<1x128xf32> -> vector<1x384xf32>
      %182 = tpu.concatenate %128, %176, %180 in 1 : vector<1x128xf32>, vector<1x128xf32>, vector<1x128xf32> -> vector<1x384xf32>
      %183 = vector.broadcast %15 : vector<32x1xf32> to vector<32x384xf32>
      %184 = vector.broadcast %181 : vector<1x384xf32> to vector<32x384xf32>
      %185 = arith.subf %183, %184 : vector<32x384xf32>
      %186 = math.absf %185 : vector<32x384xf32>
      %cst_40 = arith.constant 1.000000e+00 : f32
      %187 = vector.broadcast %cst_40 : f32 to vector<32x384xf32>
      %188 = arith.subf %187, %186 : vector<32x384xf32>
      %cst_41 = arith.constant 0.000000e+00 : f32
      %189 = vector.broadcast %cst_41 : f32 to vector<32x384xf32>
      %190 = arith.maximumf %189, %188 : vector<32x384xf32>
      %191 = vector.broadcast %17 : vector<32x1xf32> to vector<32x384xf32>
      %192 = vector.broadcast %182 : vector<1x384xf32> to vector<32x384xf32>
      %193 = arith.subf %191, %192 : vector<32x384xf32>
      %194 = math.absf %193 : vector<32x384xf32>
      %cst_42 = arith.constant 1.000000e+00 : f32
      %195 = vector.broadcast %cst_42 : f32 to vector<32x384xf32>
      %196 = arith.subf %195, %194 : vector<32x384xf32>
      %cst_43 = arith.constant 0.000000e+00 : f32
      %197 = vector.broadcast %cst_43 : f32 to vector<32x384xf32>
      %198 = arith.maximumf %197, %196 : vector<32x384xf32>
      %cst_44 = arith.constant dense<0.000000e+00> : vector<32x384xf32>
      %199 = tpu.matmul %13, %190, %cst_44 {dimension_numbers = #tpu.dot_dimension_numbers<[1], [0], [0], [1], [0, 0, 1, 1], [], []>} : vector<32x32xf32>, vector<32x384xf32>, vector<32x384xf32> -> vector<32x384xf32>
      %200 = arith.mulf %199, %198 : vector<32x384xf32>
      %cst_45 = arith.constant dense<0.000000e+00> : vector<384xf32>
      %201 = vector.multi_reduction <add>, %200, %cst_45 [0] : vector<32x384xf32> to vector<384xf32>
      %202 = vector.shape_cast %201 : vector<384xf32> to vector<1x384xf32>
      %203 = vector.extract_strided_slice %202 {offsets = [0, 0], sizes = [1, 128], strides = [1, 1]} : vector<1x384xf32> to vector<1x128xf32>
      %204 = vector.extract_strided_slice %202 {offsets = [0, 128], sizes = [1, 128], strides = [1, 1]} : vector<1x384xf32> to vector<1x128xf32>
      %205 = vector.extract_strided_slice %202 {offsets = [0, 256], sizes = [1, 128], strides = [1, 1]} : vector<1x384xf32> to vector<1x128xf32>
      %cst_46 = arith.constant 5.000000e-01 : f32
      %206 = vector.broadcast %cst_46 : f32 to vector<1x128xf32>
      %207 = arith.mulf %206, %203 : vector<1x128xf32>
      %208 = arith.subf %162, %207 : vector<1x128xf32>
      %209 = vector.broadcast %8 : f32 to vector<1x128xf32>
      %210 = arith.mulf %208, %209 : vector<1x128xf32>
      %cst_47 = arith.constant 0.000000e+00 : f32
      %211 = vector.broadcast %cst_47 : f32 to vector<1x128xf32>
      %212 = arith.cmpf ogt, %210, %211 : vector<1x128xf32>
      %213 = vector.broadcast %8 : f32 to vector<1x128xf32>
      %214 = arith.subf %168, %213 : vector<1x128xf32>
      %cst_48 = arith.constant 5.000000e-01 : f32
      %215 = vector.broadcast %cst_48 : f32 to vector<1x128xf32>
      %216 = arith.mulf %215, %214 : vector<1x128xf32>
      %217 = arith.mulf %216, %204 : vector<1x128xf32>
      %cst_49 = arith.constant 5.000000e-01 : f32
      %218 = vector.broadcast %cst_49 : f32 to vector<1x128xf32>
      %219 = arith.mulf %218, %168 : vector<1x128xf32>
      %220 = arith.mulf %219, %205 : vector<1x128xf32>
      %221 = arith.addf %217, %220 : vector<1x128xf32>
      %cst_50 = arith.constant 0.000000e+00 : f32
      %222 = vector.broadcast %cst_50 : f32 to vector<1x128xf32>
      %223 = arith.select %212, %221, %222 : vector<1x128xi1>, vector<1x128xf32>
      %224 = arith.addf %210, %223 : vector<1x128xf32>
      %225 = vector.broadcast %2 : f32 to vector<1x128xf32>
      %226 = arith.mulf %72, %225 : vector<1x128xf32>
      %227 = vector.broadcast %2 : f32 to vector<1x128xf32>
      %228 = arith.mulf %72, %227 : vector<1x128xf32>
      %229 = arith.mulf %226, %228 : vector<1x128xf32>
      %230 = vector.broadcast %3 : f32 to vector<1x128xf32>
      %231 = arith.mulf %73, %230 : vector<1x128xf32>
      %232 = vector.broadcast %3 : f32 to vector<1x128xf32>
      %233 = arith.mulf %73, %232 : vector<1x128xf32>
      %234 = arith.mulf %231, %233 : vector<1x128xf32>
      %235 = arith.addf %229, %234 : vector<1x128xf32>
      %236 = math.sqrt %235 : vector<1x128xf32>
      %237 = arith.mulf %224, %236 : vector<1x128xf32>
      %c0_51 = arith.constant 0 : index
      %238 = arith.index_cast %48 : i32 to index
      %c0_52 = arith.constant 0 : index
      %239 = vector.load %arg8[%c0_51, %238, %c0_52] : memref<1x8x128xf32, #tpu.memory_space<vmem>>, vector<1x1x128xf32>
      %240 = vector.shape_cast %239 : vector<1x1x128xf32> to vector<1x128xf32>
      %241 = vector.shape_cast %237 : vector<1x128xf32> to vector<1x1x128xf32>
      tpu.vector_store %arg8[%c0_51, %238, %c0_52], %241 {strides = array<i32>} : memref<1x8x128xf32, #tpu.memory_space<vmem>>, vector<1x1x128xf32>,
    }
    %c8_i32_20 = arith.constant 8 : i32
    return
  }
  func.func @transform_0(%arg0: i32, %arg1: i32, %arg2: i32) -> i32 {
    %c0_i32 = arith.constant 0 : i32
    %c0_i32_0 = arith.constant 0 : i32
    return %c0_i32 : i32
  }
  func.func @transform_1(%arg0: i32, %arg1: i32, %arg2: i32) -> i32 {
    %c0_i32 = arith.constant 0 : i32
    %c0_i32_0 = arith.constant 0 : i32
    return %c0_i32 : i32
  }
  func.func @transform_2(%arg0: i32, %arg1: i32, %arg2: i32) -> i32 {
    %c0_i32 = arith.constant 0 : i32
    %c0_i32_0 = arith.constant 0 : i32
    return %c0_i32 : i32
  }
  func.func @transform_3(%arg0: i32, %arg1: i32, %arg2: i32) -> i32 {
    %c0_i32 = arith.constant 0 : i32
    %c0_i32_0 = arith.constant 0 : i32
    return %c0_i32 : i32
  }
  func.func @transform_4(%arg0: i32, %arg1: i32, %arg2: i32) -> (i32, i32, i32) {
    %c0_i32 = arith.constant 0 : i32
    %c0_i32_0 = arith.constant 0 : i32
    %c0_i32_1 = arith.constant 0 : i32
    return %arg0, %c0_i32, %c0_i32_0 : i32, i32, i32
  }
  func.func @transform_5(%arg0: i32, %arg1: i32, %arg2: i32) -> (i32, i32, i32) {
    %c0_i32 = arith.constant 0 : i32
    return %arg0, %arg1, %arg2 : i32, i32, i32
  }
}

</mosaic_0001>

<llo_original>
// kernel: tpu_custom_call.1
$region0: #{tpu_custom_call.1}
  #allocation0 [shape = 'u32[]', space=smem, size = 0x4, offset = 0x4, fixed_abs, tag = 'smem constant byte address 0x4 - core index']
  #allocation1 [shape = 'u32[144,128]{1,0:T(1,128)}', space=vmem, size = 0x12000, scoped, tag = 'internal scratch']
  %s0 = inlined_call_operand.hbm [shape: f32[9], index: 0, kind: input, shape index: {}]
  %s1 = inlined_call_operand.vmem [shape: f32[8], index: 1, kind: input, shape index: {}]
  %s2 = inlined_call_operand.vmem [shape: f32[8], index: 2, kind: input, shape index: {}]
  %s3 = inlined_call_operand.vmem [shape: s32[8], index: 3, kind: input, shape index: {}]
  %s4 = inlined_call_operand.hbm [shape: f32[2,32,32], index: 4, kind: input, shape index: {}]
  %s5 = inlined_call_operand.hbm [shape: f32[2,8,128], index: 5, kind: output, shape index: {}]
  %s6 = sld [smem:[#allocation0]]
  $region87: #{tpu_custom_call.1} parent=0
    _
  %s8 = ssub.s32 1, %s6
  %s9 = scalar_select 0, %s8, %s6
  $region1: #{tpu_custom_call.1} parent=0
    #allocation2 [shape = 'u8[512]{0}', space=smem, size = 0x200, scoped, tag = 'input window, operand 0, single buffered']
    #allocation3 [shape = 's32[2]{0}', space=sflag, size = 0x8, scoped, tag = 'scoped memory for tpu_custom_call.1']
    #allocation4 [shape = 's32[2]{0}', space=sflag, size = 0x8, scoped, tag = 'scoped memory for tpu_custom_call.1']
    #allocation5 [shape = 's32[2]{0}', space=sflag, size = 0x8, scoped, tag = 'scoped memory for tpu_custom_call.1']
    #allocation6 [shape = 's32[2]{0}', space=sflag, size = 0x8, scoped, tag = 'scoped memory for tpu_custom_call.1']
    #allocation7 [shape = 'u8[512]{0}', space=smem, size = 0x200, scoped, tag = 'input window, operand 1, single buffered']
    #allocation8 [shape = 'u8[512]{0}', space=smem, size = 0x200, scoped, tag = 'input window, operand 2, single buffered']
    #allocation9 [shape = 's32[1]{0}', space=sflag, size = 0x4, scoped, tag = 'scoped memory for tpu_custom_call.1']
    #allocation10 [shape = 'u8[512]{0}', space=smem, size = 0x200, scoped, tag = 'input window, operand 3, single buffered']
    #allocation11 [shape = 'u8[32768]{0}', space=vmem, size = 0x8000, scoped, tag = 'input window, operand 4']
    #allocation12 [shape = 'u8[8192]{0}', space=vmem, size = 0x2000, scoped, tag = 'output window, operand 0']
    %10 = vsyncpa [#allocation5], 0
    %11 = vsyncpa [#allocation6], 0
    %12 = vsyncpa [#allocation9], 0
    %13 = vsyncpa [#allocation3], 0
    %s14 = scalar_lea.sflag [#allocation3], 1
    %15 = vsyncpa %s14, 0
    %16 = vsyncpa [#allocation4], 0
    %s17 = scalar_lea.sflag [#allocation4], 1
    %18 = vsyncpa %s17, 0
    loop: start=0, step=1, limit=4
    $region2: #{tpu_custom_call.1} parent=1 // loop_pre_header
      _
    $region3: #{tpu_custom_call.1} parent=1 // loop_header
      %s20 = sphi 0, %s24
      %p21 = scmp.ge.s32.totalorder %s20, 4
      %s27 = sphi 0, %s46
      %s28 = sphi 0, %s42
      %s29 = sphi 0, %s38
      %s30 = sphi 0, %s27
      %s31 = sphi 0, %s28
      %s32 = sphi 0, %s29
      %s33 = sphi 0, %s30
      %s34 = sphi 0, %s31
      %s35 = sphi 0, %s32
      %s47 = sphi 0, %s47
      %s49 = sphi 0, %s47
      %s50 = sphi 0, %s49
      %s64 = sphi 0, %s50
      %s68 = sphi 0, %s68
      %s70 = sphi 0, %s68
      %s71 = sphi 0, %s70
      %s85 = sphi 0, %s71
      %s89 = sphi 0, %s89
      %s91 = sphi 0, %s89
      %s92 = sphi 0, %s91
      %s106 = sphi 0, %s92
      %s110 = sphi 0, %s110
      %s112 = sphi 0, %s110
      %s113 = sphi 0, %s112
      %s127 = sphi 0, %s113
      %s133 = sphi 0, %s135
      %s136 = sphi 0, %s133
      %s137 = sphi 0, %s136
      %s153 = sphi 0, %s137
      %s163 = sphi 0, %s165
      %s166 = sphi 0, %s163
      %s167 = sphi 0, %s166
      %s183 = sphi 0, %s167
    $region4: #{tpu_custom_call.1} parent=1 // loop_header_branch
      %23 = sbr.rel (%p21) target = $region8
    $region5: #{tpu_custom_call.1} parent=1 // loop_body
      %s25 = ssub.s32 %s20, 1
      %s26 = ssub.s32 %s20, 2
      %s36 = sadd.s32 1, %s29
      %p37 = scmp.ge.s32.totalorder %s36, 1
      %s38 = scalar_select %p37, 0, %s36
      %s39 = sadd.s32 1, %s28
      %s40 = scalar_select %p37, %s39, %s28
      %p41 = scmp.ge.s32.totalorder %s40, 1
      %s42 = scalar_select %p41, 0, %s40
      %s43 = sadd.s32 1, %s27
      %s44 = scalar_select %p41, %s43, %s27
      %p45 = scmp.ge.s32.totalorder %s44, 2
      %s46 = scalar_select %p45, 0, %s44
      %s48 = sadd.s32 %s47, 1
      %p51 = scmp.eq.s32.totalorder %s20, 1
      %p52 = scmp.ne.s32.totalorder %s47, %s49
      %p53 = scmp.eq.s32.totalorder %s20, 0
      %p54 = por %p52, %p53
      %p55 = scmp.ne.s32.totalorder %s47, %s49
      %p56 = scmp.eq.s32.totalorder %s25, 1
      %p57 = por %p55, %p56
      %p58 = scmp.ne.s32.totalorder %s49, %s50
      %p59 = scmp.eq.s32.totalorder %s25, 0
      %p60 = por %p58, %p59
      %p61 = scmp.ne.s32.totalorder %s49, %s50
      %p62 = scmp.eq.s32.totalorder %s26, 1
      %p63 = por %p61, %p62
      %p65 = scmp.ne.s32.totalorder %s50, %s64
      %p66 = scmp.eq.s32.totalorder %s26, 0
      %p67 = por %p65, %p66
      %s69 = sadd.s32 %s68, 1
      %p72 = scmp.eq.s32.totalorder %s20, 1
      %p73 = scmp.ne.s32.totalorder %s68, %s70
      %p74 = scmp.eq.s32.totalorder %s20, 0
      %p75 = por %p73, %p74
      %p76 = scmp.ne.s32.totalorder %s68, %s70
      %p77 = scmp.eq.s32.totalorder %s25, 1
      %p78 = por %p76, %p77
      %p79 = scmp.ne.s32.totalorder %s70, %s71
      %p80 = scmp.eq.s32.totalorder %s25, 0
      %p81 = por %p79, %p80
      %p82 = scmp.ne.s32.totalorder %s70, %s71
      %p83 = scmp.eq.s32.totalorder %s26, 1
      %p84 = por %p82, %p83
      %p86 = scmp.ne.s32.totalorder %s71, %s85
      %p87 = scmp.eq.s32.totalorder %s26, 0
      %p88 = por %p86, %p87
      %s90 = sadd.s32 %s89, 1
      %p93 = scmp.eq.s32.totalorder %s20, 1
      %p94 = scmp.ne.s32.totalorder %s89, %s91
      %p95 = scmp.eq.s32.totalorder %s20, 0
      %p96 = por %p94, %p95
      %p97 = scmp.ne.s32.totalorder %s89, %s91
      %p98 = scmp.eq.s32.totalorder %s25, 1
      %p99 = por %p97, %p98
      %p100 = scmp.ne.s32.totalorder %s91, %s92
      %p101 = scmp.eq.s32.totalorder %s25, 0
      %p102 = por %p100, %p101
      %p103 = scmp.ne.s32.totalorder %s91, %s92
      %p104 = scmp.eq.s32.totalorder %s26, 1
      %p105 = por %p103, %p104
      %p107 = scmp.ne.s32.totalorder %s92, %s106
      %p108 = scmp.eq.s32.totalorder %s26, 0
      %p109 = por %p107, %p108
      %s111 = sadd.s32 %s110, 1
      %p114 = scmp.eq.s32.totalorder %s20, 1
      %p115 = scmp.ne.s32.totalorder %s110, %s112
      %p116 = scmp.eq.s32.totalorder %s20, 0
      %p117 = por %p115, %p116
      %p118 = scmp.ne.s32.totalorder %s110, %s112
      %p119 = scmp.eq.s32.totalorder %s25, 1
      %p120 = por %p118, %p119
      %p121 = scmp.ne.s32.totalorder %s112, %s113
      %p122 = scmp.eq.s32.totalorder %s25, 0
      %p123 = por %p121, %p122
      %p124 = scmp.ne.s32.totalorder %s112, %s113
      %p125 = scmp.eq.s32.totalorder %s26, 1
      %p126 = por %p124, %p125
      %p128 = scmp.ne.s32.totalorder %s113, %s127
      %p129 = scmp.eq.s32.totalorder %s26, 0
      %p130 = por %p128, %p129
      %s131 = ssub.s32 %s27, %s46
      %p132 = scmp.eq.s32.totalorder %s131, 0
      %s134 = sadd.s32 %s133, 1
      %s135 = scalar_select %p132, %s133, %s134
      %p138 = pneg %p132
      %p139 = scmp.eq.s32.totalorder %s20, 1
      %p140 = por %p138, %p139
      %p141 = scmp.ne.s32.totalorder %s133, %s136
      %p142 = scmp.eq.s32.totalorder %s20, 0
      %p143 = por %p141, %p142
      %p144 = scmp.ne.s32.totalorder %s133, %s136
      %p145 = scmp.eq.s32.totalorder %s25, 1
      %p146 = por %p144, %p145
      %p147 = scmp.ne.s32.totalorder %s136, %s137
      %p148 = scmp.eq.s32.totalorder %s25, 0
      %p149 = por %p147, %p148
      %p150 = scmp.ne.s32.totalorder %s136, %s137
      %p151 = scmp.eq.s32.totalorder %s26, 1
      %p152 = por %p150, %p151
      %p154 = scmp.ne.s32.totalorder %s137, %s153
      %p155 = scmp.eq.s32.totalorder %s26, 0
      %p156 = por %p154, %p155
      %s157 = ssub.s32 %s27, %s46
      %s158 = ssub.s32 %s28, %s42
      %s159 = sor.u32 %s157, %s158
      %s160 = ssub.s32 %s29, %s38
      %s161 = sor.u32 %s159, %s160
      %p162 = scmp.eq.s32.totalorder %s161, 0
      %s164 = sadd.s32 %s163, 1
      %s165 = scalar_select %p162, %s163, %s164
      %p168 = pneg %p162
      %p169 = scmp.eq.s32.totalorder %s20, 1
      %p170 = por %p168, %p169
      %p171 = scmp.ne.s32.totalorder %s163, %s166
      %p172 = scmp.eq.s32.totalorder %s20, 0
      %p173 = por %p171, %p172
      %p174 = scmp.ne.s32.totalorder %s163, %s166
      %p175 = scmp.eq.s32.totalorder %s25, 1
      %p176 = por %p174, %p175
      %p177 = scmp.ne.s32.totalorder %s166, %s167
      %p178 = scmp.eq.s32.totalorder %s25, 0
      %p179 = por %p177, %p178
      %p180 = scmp.ne.s32.totalorder %s166, %s167
      %p181 = scmp.eq.s32.totalorder %s26, 1
      %p182 = por %p180, %p181
      %p184 = scmp.ne.s32.totalorder %s167, %s183
      %p185 = scmp.eq.s32.totalorder %s26, 0
      %p186 = por %p184, %p185
      %p187 = scmp.le.s32.totalorder 1, %s20
      %p188 = scmp.lt.s32.totalorder %s20, 3
      %p189 = pnand %p187, %p188
      %p190 = pneg %p189
      // Predicated region
      $region9: #{tpu_custom_call.1} parent=5 // pred_check
        _
      $region10: #{tpu_custom_call.1} parent=5 // pred_check_branch
        %192 = sbr.rel (%p189) target = $region12
      $region11: #{tpu_custom_call.1} parent=5 // pred_region
        %s193 = ssub.s32 %s20, 1
        // Predicated region
        $region13: #{tpu_custom_call.1} parent=11 // pred_check
          %p194 = pneg %p60
        $region14: #{tpu_custom_call.1} parent=11 // pred_check_branch
          %196 = sbr.rel (%p194) target = $region16
        $region15: #{tpu_custom_call.1} parent=11 // pred_region
          %s198 = ssub.s32 16, 16
          %199 = vsyncadd [#allocation5], %s198
          %202 = dma.hbm_to_smem %s0, 16, [#allocation2], [#allocation5]
        $region16: #{tpu_custom_call.1} parent=11 // pred_fallthru
          _
        // Predicated region
        $region17: #{tpu_custom_call.1} parent=11 // pred_check
          %p203 = pneg %p81
        $region18: #{tpu_custom_call.1} parent=11 // pred_check_branch
          %205 = sbr.rel (%p203) target = $region20
        $region19: #{tpu_custom_call.1} parent=11 // pred_region
          %s207 = ssub.s32 16, 16
          %208 = vsyncadd [#allocation6], %s207
          %s210 = sshll.u32 %s1, 4
          %s211 = int_to_ptr.vmem [resolvable:$true] %s210
          %213 = dma.vmem_to_smem %s211, 16, [#allocation7], [#allocation6]
        $region20: #{tpu_custom_call.1} parent=11 // pred_fallthru
          _
        // Predicated region
        $region21: #{tpu_custom_call.1} parent=11 // pred_check
          %p214 = pneg %p102
        $region22: #{tpu_custom_call.1} parent=11 // pred_check_branch
          %216 = sbr.rel (%p214) target = $region24
        $region23: #{tpu_custom_call.1} parent=11 // pred_region
          %s218 = ssub.s32 16, 16
          %219 = vsyncadd [#allocation9], %s218
          %s221 = sshll.u32 %s2, 4
          %s222 = int_to_ptr.vmem [resolvable:$true] %s221
          %224 = dma.vmem_to_smem %s222, 16, [#allocation8], [#allocation9]
        $region24: #{tpu_custom_call.1} parent=11 // pred_fallthru
          _
        // Predicated region
        $region25: #{tpu_custom_call.1} parent=11 // pred_check
          %p225 = pneg %p123
        $region26: #{tpu_custom_call.1} parent=11 // pred_check_branch
          %227 = sbr.rel (%p225) target = $region28
        $region27: #{tpu_custom_call.1} parent=11 // pred_region
          %s229 = ssub.s32 16, 16
          %230 = vsyncadd [#allocation9], %s229
          %s232 = sshll.u32 %s3, 4
          %s233 = int_to_ptr.vmem [resolvable:$true] %s232
          %235 = dma.vmem_to_smem %s233, 16, [#allocation10], [#allocation9]
        $region28: #{tpu_custom_call.1} parent=11 // pred_fallthru
          _
      $region12: #{tpu_custom_call.1} parent=5 // pred_fallthru
        _
      %p236 = scmp.lt.s32.totalorder %s20, 2
      // Predicated region
      $region29: #{tpu_custom_call.1} parent=5 // pred_check
        %p237 = pneg %p236
      $region30: #{tpu_custom_call.1} parent=5 // pred_check_branch
        %239 = sbr.rel (%p237) target = $region32
      $region31: #{tpu_custom_call.1} parent=5 // pred_region
        // Predicated region
        $region33: #{tpu_custom_call.1} parent=31 // pred_check
          %p240 = pneg %p143
        $region34: #{tpu_custom_call.1} parent=31 // pred_check_branch
          %242 = sbr.rel (%p240) target = $region36
        $region35: #{tpu_custom_call.1} parent=31 // pred_region
          %s243 = sand.u32 %s133, 1
          %s244 = scalar_lea.sflag [#allocation3], %s243
          %s245 = sand.u32 %s133, 1
          %s246 = smul.addr %s245, 32
          %s247 = scalar_lea.vmem [#allocation11], %s246
          %s249 = ssub.s32 512, 512
          %250 = vsyncadd %s244, %s249
          %s251 = smul.addr %s27, 4
          %s252 = smul.addr %s251, 128
          %s253 = scalar_lea.hbm %s4, %s252
          %s254 = sshll.u32 %s247, 4
          %s255 = int_to_ptr.vmem [resolvable:$true] %s254
          %260 = dma.hbm_to_vmem [thread:$0]  %s253, 512, %s255, %s244, 128, 128, 8
        $region36: #{tpu_custom_call.1} parent=31 // pred_fallthru
          _
      $region32: #{tpu_custom_call.1} parent=5 // pred_fallthru
        _
      %p261 = scmp.le.s32.totalorder 1, %s20
      %p262 = scmp.lt.s32.totalorder %s20, 3
      %p263 = pnand %p261, %p262
      %p264 = pneg %p263
      // Predicated region
      $region37: #{tpu_custom_call.1} parent=5 // pred_check
        _
      $region38: #{tpu_custom_call.1} parent=5 // pred_check_branch
        %266 = sbr.rel (%p263) target = $region40
      $region39: #{tpu_custom_call.1} parent=5 // pred_region
        %s267 = ssub.s32 %s20, 1
        // Predicated region
        $region41: #{tpu_custom_call.1} parent=39 // pred_check
          %p268 = pneg %p60
        $region42: #{tpu_custom_call.1} parent=39 // pred_check_branch
          %270 = sbr.rel (%p268) target = $region44
        $region43: #{tpu_custom_call.1} parent=39 // pred_region
          %271 = dma.done [#allocation5], 16
        $region44: #{tpu_custom_call.1} parent=39 // pred_fallthru
          _
        // Predicated region
        $region45: #{tpu_custom_call.1} parent=39 // pred_check
          %p272 = pneg %p81
        $region46: #{tpu_custom_call.1} parent=39 // pred_check_branch
          %274 = sbr.rel (%p272) target = $region48
        $region47: #{tpu_custom_call.1} parent=39 // pred_region
          %275 = dma.done [#allocation6], 16
        $region48: #{tpu_custom_call.1} parent=39 // pred_fallthru
          _
        // Predicated region
        $region49: #{tpu_custom_call.1} parent=39 // pred_check
          %p276 = pneg %p102
        $region50: #{tpu_custom_call.1} parent=39 // pred_check_branch
          %278 = sbr.rel (%p276) target = $region52
        $region51: #{tpu_custom_call.1} parent=39 // pred_region
          %279 = dma.done [#allocation9], 16
        $region52: #{tpu_custom_call.1} parent=39 // pred_fallthru
          _
        // Predicated region
        $region53: #{tpu_custom_call.1} parent=39 // pred_check
          %p280 = pneg %p123
        $region54: #{tpu_custom_call.1} parent=39 // pred_check_branch
          %282 = sbr.rel (%p280) target = $region56
        $region55: #{tpu_custom_call.1} parent=39 // pred_region
          %283 = dma.done [#allocation9], 16
        $region56: #{tpu_custom_call.1} parent=39 // pred_fallthru
          _
        %s284 = sand.u32 %s136, 1
        %s285 = scalar_lea.sflag [#allocation3], %s284
        %s286 = sand.u32 %s136, 1
        %s287 = smul.addr %s286, 32
        %s288 = scalar_lea.vmem [#allocation11], %s287
        // Predicated region
        $region57: #{tpu_custom_call.1} parent=39 // pred_check
          %p289 = pneg %p149
        $region58: #{tpu_custom_call.1} parent=39 // pred_check_branch
          %291 = sbr.rel (%p289) target = $region60
        $region59: #{tpu_custom_call.1} parent=39 // pred_region
          %292 = dma.done %s285, 512
        $region60: #{tpu_custom_call.1} parent=39 // pred_fallthru
          _
        %293 = sfence
        %p294 = pneg %p60
        %p295 = pneg %p57
        %p296 = pneg %p81
        %p297 = pneg %p78
        %p298 = pneg %p102
        %p299 = pneg %p99
        %p300 = pneg %p123
        %p301 = pneg %p120
        %s302 = sand.u32 %s136, 1
        %s303 = scalar_lea.sflag [#allocation3], %s302
        %s304 = sand.u32 %s136, 1
        %s305 = smul.addr %s304, 32
        %s306 = scalar_lea.vmem [#allocation11], %s305
        %p307 = pneg %p149
        %p308 = pneg %p146
        %p309 = pneg %p179
        %p310 = pneg %p176
        %s311 = sand.u32 %s166, 1
        %s312 = scalar_lea.sflag [#allocation4], %s311
        %s313 = sand.u32 %s166, 1
        %s314 = smul.addr %s313, 8
        %s315 = scalar_lea.vmem [#allocation12], %s314
        %s316 = sld [smem:[#allocation2]]
        %s317 = sld [smem:[#allocation2 + $0x1]]
        %s318 = sld [smem:[#allocation2 + $0x2]]
        %s319 = sld [smem:[#allocation2 + $0x3]]
        %s320 = sld [smem:[#allocation2 + $0x4]]
        %s321 = sld [smem:[#allocation2 + $0x5]]
        %s322 = sld [smem:[#allocation2 + $0x6]]
        %s323 = sld [smem:[#allocation2 + $0x7]]
        %s324 = sld [smem:[#allocation2 + $0x8]]
        %v325 = vstv %s318
        %v326 = vrcp.pop %v325
        %s327 = vtos %v326
        %v328 = vstv %s319
        %v329 = vrcp.pop %v328
        %s330 = vtos %v329
        %v331 = vstv %s324
        %v332 = vrcp.pop %v331
        %s333 = vtos %v332
        %v334 = vld [vmem:[%s288] sm:$0xff]
        %v335 = vld [vmem:[%s288 + $0x8] sm:$0xff]
        %v336 = vld [vmem:[%s288 + $0x10] sm:$0xff]
        %v337 = vld [vmem:[%s288 + $0x18] sm:$0xff]
        %v338 = vlaneseq
        %v339 = vshrl.u32 %v338, 7
        %v340 = vadd.s32 %v339, 8
        %v341 = vadd.s32 %v339, 16
        %v342 = vadd.s32 %v339, 24
        %v343 = vcvt.s32.f32 %v339
        %v344 = vcvt.s32.f32 %v340
        %v345 = vcvt.s32.f32 %v341
        %v346 = vcvt.s32.f32 %v342
        %v347 = vlaneseq
        %v348 = vand.u32 %v347, 127
        %v349 = vcvt.s32.f32 %v348
        %s350 = smul.u32 %s32, 128
        %s351 = scvt.s32.f32 %s350
        %v352 = vstv %s351
        %v353 = vadd.f32 %v349, %v352
        %v354 = vstv %s321
        %v355 = vmul.f32 %v353, %v354
        %v356 = vstv %s320
        %v357 = vadd.f32 %v355, %v356
        %s358 = ssub.f32 %s316, 0.5
        %s359 = smul.f32 %s318, 32.0
        %s360 = sadd.f32 %s359, %s316
        %s361 = ssub.f32 %s360, 0.5
        %s362 = ssub.f32 %s317, 0.5
        %s363 = smul.f32 %s319, 32.0
        %s364 = sadd.f32 %s363, %s317
        %s365 = ssub.f32 %s364, 0.5
        %s366 = smul.u32 %s31, 8
        loop: start=0, step=1, limit=8
        $region61: #{tpu_custom_call.1} parent=39 // loop_pre_header
          _
        $region62: #{tpu_custom_call.1} parent=39 // loop_header
          %s368 = sphi 0, %s372
          %p369 = scmp.ge.s32.totalorder %s368, 8
        $region63: #{tpu_custom_call.1} parent=39 // loop_header_branch
          %371 = sbr.rel (%p369) target = $region67
        $region64: #{tpu_custom_call.1} parent=39 // loop_body
          %s373 = sadd.s32 %s366, %s368
          %s374 = sld [smem:[#allocation7 + %s373]]
          %s375 = sld [smem:[#allocation8 + %s373]]
          %s376 = ssub.f32 0.0, %s322
          %s377 = smul.f32 %s374, %s376
          %s378 = smul.f32 %s375, %s376
          %s379 = smul.f32 %s374, %s323
          %v380 = vstv %s375
          %v381 = vmul.f32 %v380, %v357
          %v382 = vstv %s379
          %v383 = vsub.f32 %v382, %v381
          %s384 = smul.f32 %s375, %s323
          %v385 = vstv %s374
          %v386 = vmul.f32 %v385, %v357
          %v387 = vstv %s384
          %v388 = vadd.f32 %v387, %v386
          %v389 = vmul.f32 %v383, %v383
          %v390 = vmul.f32 %v388, %v388
          %v391 = vadd.f32 %v389, %v390
          %v392 = vrsqrt.pop %v391
          %v393 = vmul.f32 %v383, %v392
          %v394 = vmul.f32 %v388, %v392
          %vm395 = vcmp.ne.f32.partialorder %v393, 0.0
          %v396 = vrcp.pop %v393
          %v397 = vmul.f32 1.0, %v396
          %s398 = ssub.f32 %s358, %s377
          %v399 = vstv %s398
          %v400 = vmul.f32 %v399, %v397
          %s401 = ssub.f32 %s361, %s377
          %v402 = vstv %s401
          %v403 = vmul.f32 %v402, %v397
          %v404 = vmin.f32 %v400, %v403
          %v405 = vsel %vm395, %v404, 0.0
          %v406 = vmax.f32 %v400, %v403
          %v407 = vsel %vm395, %v406, inf
          %vm408 = vcmp.ne.f32.partialorder %v394, 0.0
          %v409 = vrcp.pop %v394
          %v410 = vmul.f32 1.0, %v409
          %s411 = ssub.f32 %s362, %s378
          %v412 = vstv %s411
          %v413 = vmul.f32 %v412, %v410
          %s414 = ssub.f32 %s365, %s378
          %v415 = vstv %s414
          %v416 = vmul.f32 %v415, %v410
          %v417 = vmin.f32 %v413, %v416
          %v418 = vmax.f32 %v405, %v417
          %v419 = vsel %vm408, %v418, %v405
          %v420 = vmax.f32 %v413, %v416
          %v421 = vmin.f32 %v407, %v420
          %v422 = vsel %vm408, %v421, %v407
          %s423 = smul.f32 %s324, 0.5
          %v424 = vstv %s423
          %v425 = vadd.f32 %v419, %v424
          %v426 = vsub.f32 %v422, %v425
          %v427 = vstv %s333
          %v428 = vmul.f32 %v426, %v427
          %v429 = vceil.f32 %v428
          %v430 = vmax.f32 %v429, 0.0
          %v431 = vmul.f32 %v425, %v393
          %v432 = vstv %s377
          %v433 = vadd.f32 %v432, %v431
          %v434 = vstv %s316
          %v435 = vsub.f32 %v433, %v434
          %v436 = vstv %s327
          %v437 = vmul.f32 %v435, %v436
          %v438 = vmul.f32 %v425, %v394
          %v439 = vstv %s378
          %v440 = vadd.f32 %v439, %v438
          %v441 = vstv %s317
          %v442 = vsub.f32 %v440, %v441
          %v443 = vstv %s330
          %v444 = vmul.f32 %v442, %v443
          %s445 = smul.f32 %s324, %s327
          %v446 = vstv %s445
          %v447 = vmul.f32 %v446, %v393
          %s448 = smul.f32 %s324, %s330
          %v449 = vstv %s448
          %v450 = vmul.f32 %v449, %v394
          %s451 = sadd.s32 %s373, %s32
          %s452 = sld [smem:[#allocation10 + %s451]]
          // While loop
          $region68: #{tpu_custom_call.1} parent=64 // loop_pre_header
            _
          $region69: #{tpu_custom_call.1} parent=64 // loop_header
            %s454 = sphi 0, %s456
            %p455 = scmp.ge.s32.totalorder %s454, %s452
            %v459 = vphi 0.0, %v1319
            %v460 = vphi 0.0, %v1320
            %v461 = vphi 0.0, %v1321
            %v462 = vphi 0.0, %v1322
            %v463 = vphi 0.0, %v1323
            %v464 = vphi 0.0, %v1324
            %v465 = vphi 0.0, %v1325
            %v466 = vphi 0.0, %v1326
          $region70: #{tpu_custom_call.1} parent=64 // loop_header_branch
            %458 = sbr.rel (%p455) target = $region74
          $region71: #{tpu_custom_call.1} parent=64 // loop_body
            %s467 = smul.u32 %s454, 8
            %s468 = scvt.s32.f32 %s467
            %v469 = vstv %s468
            %v470 = vadd.f32 %v469, 0.0
            %v471 = vadd.f32 %v469, 1.0
            %v472 = vadd.f32 %v469, 2.0
            %v473 = vadd.f32 %v469, 3.0
            %v474 = vadd.f32 %v469, 4.0
            %v475 = vadd.f32 %v469, 5.0
            %v476 = vadd.f32 %v469, 6.0
            %v477 = vadd.f32 %v469, 7.0
            %vm478 = vcmp.lt.f32.partialorder %v470, %v430
            %vm479 = vcmp.lt.f32.partialorder %v471, %v430
            %vm480 = vcmp.lt.f32.partialorder %v472, %v430
            %vm481 = vcmp.lt.f32.partialorder %v473, %v430
            %vm482 = vcmp.lt.f32.partialorder %v474, %v430
            %vm483 = vcmp.lt.f32.partialorder %v475, %v430
            %vm484 = vcmp.lt.f32.partialorder %v476, %v430
            %vm485 = vcmp.lt.f32.partialorder %v477, %v430
            %v486 = vmul.f32 %v470, %v447
            %v487 = vmul.f32 %v471, %v447
            %v488 = vmul.f32 %v472, %v447
            %v489 = vmul.f32 %v473, %v447
            %v490 = vmul.f32 %v474, %v447
            %v491 = vmul.f32 %v475, %v447
            %v492 = vmul.f32 %v476, %v447
            %v493 = vmul.f32 %v477, %v447
            %v494 = vadd.f32 %v437, %v486
            %v495 = vadd.f32 %v437, %v487
            %v496 = vadd.f32 %v437, %v488
            %v497 = vadd.f32 %v437, %v489
            %v498 = vadd.f32 %v437, %v490
            %v499 = vadd.f32 %v437, %v491
            %v500 = vadd.f32 %v437, %v492
            %v501 = vadd.f32 %v437, %v493
            %v502 = vsel %vm478, %v494, -2.0
            %v503 = vsel %vm479, %v495, -2.0
            %v504 = vsel %vm480, %v496, -2.0
            %v505 = vsel %vm481, %v497, -2.0
            %v506 = vsel %vm482, %v498, -2.0
            %v507 = vsel %vm483, %v499, -2.0
            %v508 = vsel %vm484, %v500, -2.0
            %v509 = vsel %vm485, %v501, -2.0
            %v510 = vmul.f32 %v470, %v450
            %v511 = vmul.f32 %v471, %v450
            %v512 = vmul.f32 %v472, %v450
            %v513 = vmul.f32 %v473, %v450
            %v514 = vmul.f32 %v474, %v450
            %v515 = vmul.f32 %v475, %v450
            %v516 = vmul.f32 %v476, %v450
            %v517 = vmul.f32 %v477, %v450
            %v518 = vadd.f32 %v444, %v510
            %v519 = vadd.f32 %v444, %v511
            %v520 = vadd.f32 %v444, %v512
            %v521 = vadd.f32 %v444, %v513
            %v522 = vadd.f32 %v444, %v514
            %v523 = vadd.f32 %v444, %v515
            %v524 = vadd.f32 %v444, %v516
            %v525 = vadd.f32 %v444, %v517
            %v526 = vlaneseq
            %v527 = vshrl.u32 %v526, 7
            %v528 = vsub.s32 0, %v527
            %v529 = vrot.slane %v502, %v528
            %v530 = vlaneseq
            %v531 = vshrl.u32 %v530, 7
            %v532 = vsub.s32 0, %v531
            %v533 = vrot.slane %v503, %v532
            %v534 = vlaneseq
            %v535 = vshrl.u32 %v534, 7
            %v536 = vsub.s32 0, %v535
            %v537 = vrot.slane %v504, %v536
            %v538 = vlaneseq
            %v539 = vshrl.u32 %v538, 7
            %v540 = vsub.s32 0, %v539
            %v541 = vrot.slane %v505, %v540
            %v542 = vlaneseq
            %v543 = vshrl.u32 %v542, 7
            %v544 = vsub.s32 0, %v543
            %v545 = vrot.slane %v506, %v544
            %v546 = vlaneseq
            %v547 = vshrl.u32 %v546, 7
            %v548 = vsub.s32 0, %v547
            %v549 = vrot.slane %v507, %v548
            %v550 = vlaneseq
            %v551 = vshrl.u32 %v550, 7
            %v552 = vsub.s32 0, %v551
            %v553 = vrot.slane %v508, %v552
            %v554 = vlaneseq
            %v555 = vshrl.u32 %v554, 7
            %v556 = vsub.s32 0, %v555
            %v557 = vrot.slane %v509, %v556
            %v558 = vsub.f32 %v343, %v529
            %v559 = vsub.f32 %v343, %v533
            %v560 = vsub.f32 %v343, %v537
            %v561 = vsub.f32 %v343, %v541
            %v562 = vsub.f32 %v343, %v545
            %v563 = vsub.f32 %v343, %v549
            %v564 = vsub.f32 %v343, %v553
            %v565 = vsub.f32 %v343, %v557
            %v566 = vsub.f32 %v344, %v529
            %v567 = vsub.f32 %v344, %v533
            %v568 = vsub.f32 %v344, %v537
            %v569 = vsub.f32 %v344, %v541
            %v570 = vsub.f32 %v344, %v545
            %v571 = vsub.f32 %v344, %v549
            %v572 = vsub.f32 %v344, %v553
            %v573 = vsub.f32 %v344, %v557
            %v574 = vsub.f32 %v345, %v529
            %v575 = vsub.f32 %v345, %v533
            %v576 = vsub.f32 %v345, %v537
            %v577 = vsub.f32 %v345, %v541
            %v578 = vsub.f32 %v345, %v545
            %v579 = vsub.f32 %v345, %v549
            %v580 = vsub.f32 %v345, %v553
            %v581 = vsub.f32 %v345, %v557
            %v582 = vsub.f32 %v346, %v529
            %v583 = vsub.f32 %v346, %v533
            %v584 = vsub.f32 %v346, %v537
            %v585 = vsub.f32 %v346, %v541
            %v586 = vsub.f32 %v346, %v545
            %v587 = vsub.f32 %v346, %v549
            %v588 = vsub.f32 %v346, %v553
            %v589 = vsub.f32 %v346, %v557
            %v590 = vand.u32 2147483647, %v558
            %v591 = vand.u32 2147483647, %v559
            %v592 = vand.u32 2147483647, %v560
            %v593 = vand.u32 2147483647, %v561
            %v594 = vand.u32 2147483647, %v562
            %v595 = vand.u32 2147483647, %v563
            %v596 = vand.u32 2147483647, %v564
            %v597 = vand.u32 2147483647, %v565
            %v598 = vand.u32 2147483647, %v566
            %v599 = vand.u32 2147483647, %v567
            %v600 = vand.u32 2147483647, %v568
            %v601 = vand.u32 2147483647, %v569
            %v602 = vand.u32 2147483647, %v570
            %v603 = vand.u32 2147483647, %v571
            %v604 = vand.u32 2147483647, %v572
            %v605 = vand.u32 2147483647, %v573
            %v606 = vand.u32 2147483647, %v574
            %v607 = vand.u32 2147483647, %v575
            %v608 = vand.u32 2147483647, %v576
            %v609 = vand.u32 2147483647, %v577
            %v610 = vand.u32 2147483647, %v578
            %v611 = vand.u32 2147483647, %v579
            %v612 = vand.u32 2147483647, %v580
            %v613 = vand.u32 2147483647, %v581
            %v614 = vand.u32 2147483647, %v582
            %v615 = vand.u32 2147483647, %v583
            %v616 = vand.u32 2147483647, %v584
            %v617 = vand.u32 2147483647, %v585
            %v618 = vand.u32 2147483647, %v586
            %v619 = vand.u32 2147483647, %v587
            %v620 = vand.u32 2147483647, %v588
            %v621 = vand.u32 2147483647, %v589
            %v622 = vsub.f32 1.0, %v590
            %v623 = vsub.f32 1.0, %v591
            %v624 = vsub.f32 1.0, %v592
            %v625 = vsub.f32 1.0, %v593
            %v626 = vsub.f32 1.0, %v594
            %v627 = vsub.f32 1.0, %v595
            %v628 = vsub.f32 1.0, %v596
            %v629 = vsub.f32 1.0, %v597
            %v630 = vsub.f32 1.0, %v598
            %v631 = vsub.f32 1.0, %v599
            %v632 = vsub.f32 1.0, %v600
            %v633 = vsub.f32 1.0, %v601
            %v634 = vsub.f32 1.0, %v602
            %v635 = vsub.f32 1.0, %v603
            %v636 = vsub.f32 1.0, %v604
            %v637 = vsub.f32 1.0, %v605
            %v638 = vsub.f32 1.0, %v606
            %v639 = vsub.f32 1.0, %v607
            %v640 = vsub.f32 1.0, %v608
            %v641 = vsub.f32 1.0, %v609
            %v642 = vsub.f32 1.0, %v610
            %v643 = vsub.f32 1.0, %v611
            %v644 = vsub.f32 1.0, %v612
            %v645 = vsub.f32 1.0, %v613
            %v646 = vsub.f32 1.0, %v614
            %v647 = vsub.f32 1.0, %v615
            %v648 = vsub.f32 1.0, %v616
            %v649 = vsub.f32 1.0, %v617
            %v650 = vsub.f32 1.0, %v618
            %v651 = vsub.f32 1.0, %v619
            %v652 = vsub.f32 1.0, %v620
            %v653 = vsub.f32 1.0, %v621
            %v654 = vmax.f32 %v622, 0.0
            %v655 = vmax.f32 %v623, 0.0
            %v656 = vmax.f32 %v624, 0.0
            %v657 = vmax.f32 %v625, 0.0
            %v658 = vmax.f32 %v626, 0.0
            %v659 = vmax.f32 %v627, 0.0
            %v660 = vmax.f32 %v628, 0.0
            %v661 = vmax.f32 %v629, 0.0
            %v662 = vmax.f32 %v630, 0.0
            %v663 = vmax.f32 %v631, 0.0
            %v664 = vmax.f32 %v632, 0.0
            %v665 = vmax.f32 %v633, 0.0
            %v666 = vmax.f32 %v634, 0.0
            %v667 = vmax.f32 %v635, 0.0
            %v668 = vmax.f32 %v636, 0.0
            %v669 = vmax.f32 %v637, 0.0
            %v670 = vmax.f32 %v638, 0.0
            %v671 = vmax.f32 %v639, 0.0
            %v672 = vmax.f32 %v640, 0.0
            %v673 = vmax.f32 %v641, 0.0
            %v674 = vmax.f32 %v642, 0.0
            %v675 = vmax.f32 %v643, 0.0
            %v676 = vmax.f32 %v644, 0.0
            %v677 = vmax.f32 %v645, 0.0
            %v678 = vmax.f32 %v646, 0.0
            %v679 = vmax.f32 %v647, 0.0
            %v680 = vmax.f32 %v648, 0.0
            %v681 = vmax.f32 %v649, 0.0
            %v682 = vmax.f32 %v650, 0.0
            %v683 = vmax.f32 %v651, 0.0
            %v684 = vmax.f32 %v652, 0.0
            %v685 = vmax.f32 %v653, 0.0
            %v686 = vlaneseq
            %v687 = vshrl.u32 %v686, 7
            %v688 = vsub.s32 0, %v687
            %v689 = vrot.slane %v518, %v688
            %v690 = vlaneseq
            %v691 = vshrl.u32 %v690, 7
            %v692 = vsub.s32 0, %v691
            %v693 = vrot.slane %v519, %v692
            %v694 = vlaneseq
            %v695 = vshrl.u32 %v694, 7
            %v696 = vsub.s32 0, %v695
            %v697 = vrot.slane %v520, %v696
            %v698 = vlaneseq
            %v699 = vshrl.u32 %v698, 7
            %v700 = vsub.s32 0, %v699
            %v701 = vrot.slane %v521, %v700
            %v702 = vlaneseq
            %v703 = vshrl.u32 %v702, 7
            %v704 = vsub.s32 0, %v703
            %v705 = vrot.slane %v522, %v704
            %v706 = vlaneseq
            %v707 = vshrl.u32 %v706, 7
            %v708 = vsub.s32 0, %v707
            %v709 = vrot.slane %v523, %v708
            %v710 = vlaneseq
            %v711 = vshrl.u32 %v710, 7
            %v712 = vsub.s32 0, %v711
            %v713 = vrot.slane %v524, %v712
            %v714 = vlaneseq
            %v715 = vshrl.u32 %v714, 7
            %v716 = vsub.s32 0, %v715
            %v717 = vrot.slane %v525, %v716
            %v718 = vsub.f32 %v343, %v689
            %v719 = vsub.f32 %v343, %v693
            %v720 = vsub.f32 %v343, %v697
            %v721 = vsub.f32 %v343, %v701
            %v722 = vsub.f32 %v343, %v705
            %v723 = vsub.f32 %v343, %v709
            %v724 = vsub.f32 %v343, %v713
            %v725 = vsub.f32 %v343, %v717
            %v726 = vsub.f32 %v344, %v689
            %v727 = vsub.f32 %v344, %v693
            %v728 = vsub.f32 %v344, %v697
            %v729 = vsub.f32 %v344, %v701
            %v730 = vsub.f32 %v344, %v705
            %v731 = vsub.f32 %v344, %v709
            %v732 = vsub.f32 %v344, %v713
            %v733 = vsub.f32 %v344, %v717
            %v734 = vsub.f32 %v345, %v689
            %v735 = vsub.f32 %v345, %v693
            %v736 = vsub.f32 %v345, %v697
            %v737 = vsub.f32 %v345, %v701
            %v738 = vsub.f32 %v345, %v705
            %v739 = vsub.f32 %v345, %v709
            %v740 = vsub.f32 %v345, %v713
            %v741 = vsub.f32 %v345, %v717
            %v742 = vsub.f32 %v346, %v689
            %v743 = vsub.f32 %v346, %v693
            %v744 = vsub.f32 %v346, %v697
            %v745 = vsub.f32 %v346, %v701
            %v746 = vsub.f32 %v346, %v705
            %v747 = vsub.f32 %v346, %v709
            %v748 = vsub.f32 %v346, %v713
            %v749 = vsub.f32 %v346, %v717
            %v750 = vand.u32 2147483647, %v718
            %v751 = vand.u32 2147483647, %v719
            %v752 = vand.u32 2147483647, %v720
            %v753 = vand.u32 2147483647, %v721
            %v754 = vand.u32 2147483647, %v722
            %v755 = vand.u32 2147483647, %v723
            %v756 = vand.u32 2147483647, %v724
            %v757 = vand.u32 2147483647, %v725
            %v758 = vand.u32 2147483647, %v726
            %v759 = vand.u32 2147483647, %v727
            %v760 = vand.u32 2147483647, %v728
            %v761 = vand.u32 2147483647, %v729
            %v762 = vand.u32 2147483647, %v730
            %v763 = vand.u32 2147483647, %v731
            %v764 = vand.u32 2147483647, %v732
            %v765 = vand.u32 2147483647, %v733
            %v766 = vand.u32 2147483647, %v734
            %v767 = vand.u32 2147483647, %v735
            %v768 = vand.u32 2147483647, %v736
            %v769 = vand.u32 2147483647, %v737
            %v770 = vand.u32 2147483647, %v738
            %v771 = vand.u32 2147483647, %v739
            %v772 = vand.u32 2147483647, %v740
            %v773 = vand.u32 2147483647, %v741
            %v774 = vand.u32 2147483647, %v742
            %v775 = vand.u32 2147483647, %v743
            %v776 = vand.u32 2147483647, %v744
            %v777 = vand.u32 2147483647, %v745
            %v778 = vand.u32 2147483647, %v746
            %v779 = vand.u32 2147483647, %v747
            %v780 = vand.u32 2147483647, %v748
            %v781 = vand.u32 2147483647, %v749
            %v782 = vsub.f32 1.0, %v750
            %v783 = vsub.f32 1.0, %v751
            %v784 = vsub.f32 1.0, %v752
            %v785 = vsub.f32 1.0, %v753
            %v786 = vsub.f32 1.0, %v754
            %v787 = vsub.f32 1.0, %v755
            %v788 = vsub.f32 1.0, %v756
            %v789 = vsub.f32 1.0, %v757
            %v790 = vsub.f32 1.0, %v758
            %v791 = vsub.f32 1.0, %v759
            %v792 = vsub.f32 1.0, %v760
            %v793 = vsub.f32 1.0, %v761
            %v794 = vsub.f32 1.0, %v762
            %v795 = vsub.f32 1.0, %v763
            %v796 = vsub.f32 1.0, %v764
            %v797 = vsub.f32 1.0, %v765
            %v798 = vsub.f32 1.0, %v766
            %v799 = vsub.f32 1.0, %v767
            %v800 = vsub.f32 1.0, %v768
            %v801 = vsub.f32 1.0, %v769
            %v802 = vsub.f32 1.0, %v770
            %v803 = vsub.f32 1.0, %v771
            %v804 = vsub.f32 1.0, %v772
            %v805 = vsub.f32 1.0, %v773
            %v806 = vsub.f32 1.0, %v774
            %v807 = vsub.f32 1.0, %v775
            %v808 = vsub.f32 1.0, %v776
            %v809 = vsub.f32 1.0, %v777
            %v810 = vsub.f32 1.0, %v778
            %v811 = vsub.f32 1.0, %v779
            %v812 = vsub.f32 1.0, %v780
            %v813 = vsub.f32 1.0, %v781
            %v814 = vmax.f32 %v782, 0.0
            %v815 = vmax.f32 %v783, 0.0
            %v816 = vmax.f32 %v784, 0.0
            %v817 = vmax.f32 %v785, 0.0
            %v818 = vmax.f32 %v786, 0.0
            %v819 = vmax.f32 %v787, 0.0
            %v820 = vmax.f32 %v788, 0.0
            %v821 = vmax.f32 %v789, 0.0
            %v822 = vmax.f32 %v790, 0.0
            %v823 = vmax.f32 %v791, 0.0
            %v824 = vmax.f32 %v792, 0.0
            %v825 = vmax.f32 %v793, 0.0
            %v826 = vmax.f32 %v794, 0.0
            %v827 = vmax.f32 %v795, 0.0
            %v828 = vmax.f32 %v796, 0.0
            %v829 = vmax.f32 %v797, 0.0
            %v830 = vmax.f32 %v798, 0.0
            %v831 = vmax.f32 %v799, 0.0
            %v832 = vmax.f32 %v800, 0.0
            %v833 = vmax.f32 %v801, 0.0
            %v834 = vmax.f32 %v802, 0.0
            %v835 = vmax.f32 %v803, 0.0
            %v836 = vmax.f32 %v804, 0.0
            %v837 = vmax.f32 %v805, 0.0
            %v838 = vmax.f32 %v806, 0.0
            %v839 = vmax.f32 %v807, 0.0
            %v840 = vmax.f32 %v808, 0.0
            %v841 = vmax.f32 %v809, 0.0
            %v842 = vmax.f32 %v810, 0.0
            %v843 = vmax.f32 %v811, 0.0
            %v844 = vmax.f32 %v812, 0.0
            %v845 = vmax.f32 %v813, 0.0
            %vm846 = vcmask 261120
            %v848 = vsel %vm846, %v334, 0
            %v851 = vsel %vm846, %v335, 0
            %v854 = vsel %vm846, %v336, 0
            %v857 = vsel %vm846, %v337, 0
            %859 = vmatprep.subr.mxu0 %v655
            %860 = vmatpush1.msra.mxu0 %v654
            %861 = vmatprep.subr.mxu0 %v663
            %862 = vmatpush1.msra.mxu0 %v662
            %863 = vmatprep.subr.mxu0 %v671
            %864 = vmatpush1.msra.mxu0 %v670
            %865 = vmatprep.subr.mxu0 %v679
            %866 = vmatpush1.msra.mxu0 %v678
            %867 = vmatprep.subr.mxu0 0.0
            %868 = vmatpush1.msra.mxu0 0.0
            %869 = vmatprep.subr.mxu0 0.0
            %870 = vmatpush1.msra.mxu0 0.0
            %871 = vmatprep.subr.mxu0 0.0
            %872 = vmatpush1.msra.mxu0 0.0
            %873 = vmatprep.subr.mxu0 0.0
            %874 = vmatpush1.msra.mxu0 0.0
            %875 = vmatprep.subr.mxu0 0.0
            %876 = vmatpush1.msra.mxu0 0.0
            %877 = vmatprep.subr.mxu0 0.0
            %878 = vmatpush1.msra.mxu0 0.0
            %879 = vmatprep.subr.mxu0 0.0
            %880 = vmatpush1.msra.mxu0 0.0
            %881 = vmatprep.subr.mxu0 0.0
            %882 = vmatpush1.msra.mxu0 0.0
            %883 = vmatprep.subr.mxu0 0.0
            %884 = vmatpush1.msra.mxu0 0.0
            %885 = vmatprep.subr.mxu0 0.0
            %886 = vmatpush1.msra.mxu0 0.0
            %887 = vmatprep.subr.mxu0 0.0
            %888 = vmatpush1.msra.mxu0 0.0
            %889 = vmatprep.subr.mxu0 0.0
            %890 = vmatpush1.msra.mxu0 0.0
            %891 = vmatprep.subr.mxu0 0.0
            %892 = vmatpush1.msra.mxu0 0.0
            %893 = vmatprep.subr.mxu0 0.0
            %894 = vmatpush1.msra.mxu0 0.0
            %895 = vmatprep.subr.mxu0 0.0
            %896 = vmatpush1.msra.mxu0 0.0
            %897 = vmatprep.subr.mxu0 0.0
            %898 = vmatpush1.msra.mxu0 0.0
            %899 = vmatprep.subr.mxu0 0.0
            %900 = vmatpush1.msra.mxu0 0.0
            %901 = vmatprep.subr.mxu0 0.0
            %902 = vmatpush1.msra.mxu0 0.0
            %903 = vmatprep.subr.mxu0 0.0
            %904 = vmatpush1.msra.mxu0 0.0
            %905 = vmatprep.subr.mxu0 0.0
            %906 = vmatpush1.msra.mxu0 0.0
            %907 = vmatprep.subr.mxu0 0.0
            %908 = vmatpush1.msra.mxu0 0.0
            %909 = vmatprep.subr.mxu0 0.0
            %910 = vmatpush1.msra.mxu0 0.0
            %911 = vmatprep.subr.mxu0 0.0
            %912 = vmatpush1.msra.mxu0 0.0
            %913 = vmatprep.subr.mxu0 0.0
            %914 = vmatpush1.msra.mxu0 0.0
            %915 = vmatprep.subr.mxu0 0.0
            %916 = vmatpush1.msra.mxu0 0.0
            %917 = vmatprep.subr.mxu0 0.0
            %918 = vmatpush1.msra.mxu0 0.0
            %919 = vmatprep.subr.mxu0 0.0
            %920 = vmatpush1.msra.mxu0 0.0
            %921 = vmatprep.subr.mxu0 0.0
            %922 = vmatpush1.msra.mxu0 0.0
            %923 = vmatprep.mubr.f32.mxu0 0.0
            %924 = vmatmul.mubr.f32.gmra.mrb[0].mxu0 %v848
            %v925 = vpop.f32.mrb[0].mxu0
            %v926 = vadd.f32 0.0, %v925
            %v927 = vpop.f32.mrb[0].mxu0
            %v928 = vadd.f32 0.0, %v927
            %929 = vmatprep.mubr.f32.mxu0 0.0
            %930 = vmatmul.mubr.f32.gmra.mrb[0].mxu0 %v851
            %v931 = vpop.f32.mrb[0].mxu0
            %v932 = vadd.f32 0.0, %v931
            %v933 = vpop.f32.mrb[0].mxu0
            %v934 = vadd.f32 0.0, %v933
            %935 = vmatprep.mubr.f32.mxu0 0.0
            %936 = vmatmul.mubr.f32.gmra.mrb[0].mxu0 %v854
            %v937 = vpop.f32.mrb[0].mxu0
            %v938 = vadd.f32 0.0, %v937
            %v939 = vpop.f32.mrb[0].mxu0
            %v940 = vadd.f32 0.0, %v939
            %941 = vmatprep.mubr.f32.mxu0 0.0
            %942 = vmatmul.mubr.f32.gmra.mrb[0].mxu0 %v857
            %v943 = vpop.f32.mrb[0].mxu0
            %v944 = vadd.f32 0.0, %v943
            %v945 = vpop.f32.mrb[0].mxu0
            %v946 = vadd.f32 0.0, %v945
            %947 = vdwg.mxu0
            %948 = vmatprep.subr.mxu0 %v657
            %949 = vmatpush1.msra.mxu0 %v656
            %950 = vmatprep.subr.mxu0 %v665
            %951 = vmatpush1.msra.mxu0 %v664
            %952 = vmatprep.subr.mxu0 %v673
            %953 = vmatpush1.msra.mxu0 %v672
            %954 = vmatprep.subr.mxu0 %v681
            %955 = vmatpush1.msra.mxu0 %v680
            %956 = vmatprep.subr.mxu0 0.0
            %957 = vmatpush1.msra.mxu0 0.0
            %958 = vmatprep.subr.mxu0 0.0
            %959 = vmatpush1.msra.mxu0 0.0
            %960 = vmatprep.subr.mxu0 0.0
            %961 = vmatpush1.msra.mxu0 0.0
            %962 = vmatprep.subr.mxu0 0.0
            %963 = vmatpush1.msra.mxu0 0.0
            %964 = vmatprep.subr.mxu0 0.0
            %965 = vmatpush1.msra.mxu0 0.0
            %966 = vmatprep.subr.mxu0 0.0
            %967 = vmatpush1.msra.mxu0 0.0
            %968 = vmatprep.subr.mxu0 0.0
            %969 = vmatpush1.msra.mxu0 0.0
            %970 = vmatprep.subr.mxu0 0.0
            %971 = vmatpush1.msra.mxu0 0.0
            %972 = vmatprep.subr.mxu0 0.0
            %973 = vmatpush1.msra.mxu0 0.0
            %974 = vmatprep.subr.mxu0 0.0
            %975 = vmatpush1.msra.mxu0 0.0
            %976 = vmatprep.subr.mxu0 0.0
            %977 = vmatpush1.msra.mxu0 0.0
            %978 = vmatprep.subr.mxu0 0.0
            %979 = vmatpush1.msra.mxu0 0.0
            %980 = vmatprep.subr.mxu0 0.0
            %981 = vmatpush1.msra.mxu0 0.0
            %982 = vmatprep.subr.mxu0 0.0
            %983 = vmatpush1.msra.mxu0 0.0
            %984 = vmatprep.subr.mxu0 0.0
            %985 = vmatpush1.msra.mxu0 0.0
            %986 = vmatprep.subr.mxu0 0.0
            %987 = vmatpush1.msra.mxu0 0.0
            %988 = vmatprep.subr.mxu0 0.0
            %989 = vmatpush1.msra.mxu0 0.0
            %990 = vmatprep.subr.mxu0 0.0
            %991 = vmatpush1.msra.mxu0 0.0
            %992 = vmatprep.subr.mxu0 0.0
            %993 = vmatpush1.msra.mxu0 0.0
            %994 = vmatprep.subr.mxu0 0.0
            %995 = vmatpush1.msra.mxu0 0.0
            %996 = vmatprep.subr.mxu0 0.0
            %997 = vmatpush1.msra.mxu0 0.0
            %998 = vmatprep.subr.mxu0 0.0
            %999 = vmatpush1.msra.mxu0 0.0
            %1000 = vmatprep.subr.mxu0 0.0
            %1001 = vmatpush1.msra.mxu0 0.0
            %1002 = vmatprep.subr.mxu0 0.0
            %1003 = vmatpush1.msra.mxu0 0.0
            %1004 = vmatprep.subr.mxu0 0.0
            %1005 = vmatpush1.msra.mxu0 0.0
            %1006 = vmatprep.subr.mxu0 0.0
            %1007 = vmatpush1.msra.mxu0 0.0
            %1008 = vmatprep.subr.mxu0 0.0
            %1009 = vmatpush1.msra.mxu0 0.0
            %1010 = vmatprep.subr.mxu0 0.0
            %1011 = vmatpush1.msra.mxu0 0.0
            %1012 = vmatprep.mubr.f32.mxu0 0.0
            %1013 = vmatmul.mubr.f32.gmra.mrb[0].mxu0 %v848
            %v1014 = vpop.f32.mrb[0].mxu0
            %v1015 = vadd.f32 0.0, %v1014
            %v1016 = vpop.f32.mrb[0].mxu0
            %v1017 = vadd.f32 0.0, %v1016
            %1018 = vmatprep.mubr.f32.mxu0 0.0
            %1019 = vmatmul.mubr.f32.gmra.mrb[0].mxu0 %v851
            %v1020 = vpop.f32.mrb[0].mxu0
            %v1021 = vadd.f32 0.0, %v1020
            %v1022 = vpop.f32.mrb[0].mxu0
            %v1023 = vadd.f32 0.0, %v1022
            %1024 = vmatprep.mubr.f32.mxu0 0.0
            %1025 = vmatmul.mubr.f32.gmra.mrb[0].mxu0 %v854
            %v1026 = vpop.f32.mrb[0].mxu0
            %v1027 = vadd.f32 0.0, %v1026
            %v1028 = vpop.f32.mrb[0].mxu0
            %v1029 = vadd.f32 0.0, %v1028
            %1030 = vmatprep.mubr.f32.mxu0 0.0
            %1031 = vmatmul.mubr.f32.gmra.mrb[0].mxu0 %v857
            %v1032 = vpop.f32.mrb[0].mxu0
            %v1033 = vadd.f32 0.0, %v1032
            %v1034 = vpop.f32.mrb[0].mxu0
            %v1035 = vadd.f32 0.0, %v1034
            %1036 = vdwg.mxu0
            %1037 = vmatprep.subr.mxu0 %v659
            %1038 = vmatpush1.msra.mxu0 %v658
            %1039 = vmatprep.subr.mxu0 %v667
            %1040 = vmatpush1.msra.mxu0 %v666
            %1041 = vmatprep.subr.mxu0 %v675
            %1042 = vmatpush1.msra.mxu0 %v674
            %1043 = vmatprep.subr.mxu0 %v683
            %1044 = vmatpush1.msra.mxu0 %v682
            %1045 = vmatprep.subr.mxu0 0.0
            %1046 = vmatpush1.msra.mxu0 0.0
            %1047 = vmatprep.subr.mxu0 0.0
            %1048 = vmatpush1.msra.mxu0 0.0
            %1049 = vmatprep.subr.mxu0 0.0
            %1050 = vmatpush1.msra.mxu0 0.0
            %1051 = vmatprep.subr.mxu0 0.0
            %1052 = vmatpush1.msra.mxu0 0.0
            %1053 = vmatprep.subr.mxu0 0.0
            %1054 = vmatpush1.msra.mxu0 0.0
            %1055 = vmatprep.subr.mxu0 0.0
            %1056 = vmatpush1.msra.mxu0 0.0
            %1057 = vmatprep.subr.mxu0 0.0
            %1058 = vmatpush1.msra.mxu0 0.0
            %1059 = vmatprep.subr.mxu0 0.0
            %1060 = vmatpush1.msra.mxu0 0.0
            %1061 = vmatprep.subr.mxu0 0.0
            %1062 = vmatpush1.msra.mxu0 0.0
            %1063 = vmatprep.subr.mxu0 0.0
            %1064 = vmatpush1.msra.mxu0 0.0
            %1065 = vmatprep.subr.mxu0 0.0
            %1066 = vmatpush1.msra.mxu0 0.0
            %1067 = vmatprep.subr.mxu0 0.0
            %1068 = vmatpush1.msra.mxu0 0.0
            %1069 = vmatprep.subr.mxu0 0.0
            %1070 = vmatpush1.msra.mxu0 0.0
            %1071 = vmatprep.subr.mxu0 0.0
            %1072 = vmatpush1.msra.mxu0 0.0
            %1073 = vmatprep.subr.mxu0 0.0
            %1074 = vmatpush1.msra.mxu0 0.0
            %1075 = vmatprep.subr.mxu0 0.0
            %1076 = vmatpush1.msra.mxu0 0.0
            %1077 = vmatprep.subr.mxu0 0.0
            %1078 = vmatpush1.msra.mxu0 0.0
            %1079 = vmatprep.subr.mxu0 0.0
            %1080 = vmatpush1.msra.mxu0 0.0
            %1081 = vmatprep.subr.mxu0 0.0
            %1082 = vmatpush1.msra.mxu0 0.0
            %1083 = vmatprep.subr.mxu0 0.0
            %1084 = vmatpush1.msra.mxu0 0.0
            %1085 = vmatprep.subr.mxu0 0.0
            %1086 = vmatpush1.msra.mxu0 0.0
            %1087 = vmatprep.subr.mxu0 0.0
            %1088 = vmatpush1.msra.mxu0 0.0
            %1089 = vmatprep.subr.mxu0 0.0
            %1090 = vmatpush1.msra.mxu0 0.0
            %1091 = vmatprep.subr.mxu0 0.0
            %1092 = vmatpush1.msra.mxu0 0.0
            %1093 = vmatprep.subr.mxu0 0.0
            %1094 = vmatpush1.msra.mxu0 0.0
            %1095 = vmatprep.subr.mxu0 0.0
            %1096 = vmatpush1.msra.mxu0 0.0
            %1097 = vmatprep.subr.mxu0 0.0
            %1098 = vmatpush1.msra.mxu0 0.0
            %1099 = vmatprep.subr.mxu0 0.0
            %1100 = vmatpush1.msra.mxu0 0.0
            %1101 = vmatprep.mubr.f32.mxu0 0.0
            %1102 = vmatmul.mubr.f32.gmra.mrb[0].mxu0 %v848
            %v1103 = vpop.f32.mrb[0].mxu0
            %v1104 = vadd.f32 0.0, %v1103
            %v1105 = vpop.f32.mrb[0].mxu0
            %v1106 = vadd.f32 0.0, %v1105
            %1107 = vmatprep.mubr.f32.mxu0 0.0
            %1108 = vmatmul.mubr.f32.gmra.mrb[0].mxu0 %v851
            %v1109 = vpop.f32.mrb[0].mxu0
            %v1110 = vadd.f32 0.0, %v1109
            %v1111 = vpop.f32.mrb[0].mxu0
            %v1112 = vadd.f32 0.0, %v1111
            %1113 = vmatprep.mubr.f32.mxu0 0.0
            %1114 = vmatmul.mubr.f32.gmra.mrb[0].mxu0 %v854
            %v1115 = vpop.f32.mrb[0].mxu0
            %v1116 = vadd.f32 0.0, %v1115
            %v1117 = vpop.f32.mrb[0].mxu0
            %v1118 = vadd.f32 0.0, %v1117
            %1119 = vmatprep.mubr.f32.mxu0 0.0
            %1120 = vmatmul.mubr.f32.gmra.mrb[0].mxu0 %v857
            %v1121 = vpop.f32.mrb[0].mxu0
            %v1122 = vadd.f32 0.0, %v1121
            %v1123 = vpop.f32.mrb[0].mxu0
            %v1124 = vadd.f32 0.0, %v1123
            %1125 = vdwg.mxu0
            %1126 = vmatprep.subr.mxu0 %v661
            %1127 = vmatpush1.msra.mxu0 %v660
            %1128 = vmatprep.subr.mxu0 %v669
            %1129 = vmatpush1.msra.mxu0 %v668
            %1130 = vmatprep.subr.mxu0 %v677
            %1131 = vmatpush1.msra.mxu0 %v676
            %1132 = vmatprep.subr.mxu0 %v685
            %1133 = vmatpush1.msra.mxu0 %v684
            %1134 = vmatprep.subr.mxu0 0.0
            %1135 = vmatpush1.msra.mxu0 0.0
            %1136 = vmatprep.subr.mxu0 0.0
            %1137 = vmatpush1.msra.mxu0 0.0
            %1138 = vmatprep.subr.mxu0 0.0
            %1139 = vmatpush1.msra.mxu0 0.0
            %1140 = vmatprep.subr.mxu0 0.0
            %1141 = vmatpush1.msra.mxu0 0.0
            %1142 = vmatprep.subr.mxu0 0.0
            %1143 = vmatpush1.msra.mxu0 0.0
            %1144 = vmatprep.subr.mxu0 0.0
            %1145 = vmatpush1.msra.mxu0 0.0
            %1146 = vmatprep.subr.mxu0 0.0
            %1147 = vmatpush1.msra.mxu0 0.0
            %1148 = vmatprep.subr.mxu0 0.0
            %1149 = vmatpush1.msra.mxu0 0.0
            %1150 = vmatprep.subr.mxu0 0.0
            %1151 = vmatpush1.msra.mxu0 0.0
            %1152 = vmatprep.subr.mxu0 0.0
            %1153 = vmatpush1.msra.mxu0 0.0
            %1154 = vmatprep.subr.mxu0 0.0
            %1155 = vmatpush1.msra.mxu0 0.0
            %1156 = vmatprep.subr.mxu0 0.0
            %1157 = vmatpush1.msra.mxu0 0.0
            %1158 = vmatprep.subr.mxu0 0.0
            %1159 = vmatpush1.msra.mxu0 0.0
            %1160 = vmatprep.subr.mxu0 0.0
            %1161 = vmatpush1.msra.mxu0 0.0
            %1162 = vmatprep.subr.mxu0 0.0
            %1163 = vmatpush1.msra.mxu0 0.0
            %1164 = vmatprep.subr.mxu0 0.0
            %1165 = vmatpush1.msra.mxu0 0.0
            %1166 = vmatprep.subr.mxu0 0.0
            %1167 = vmatpush1.msra.mxu0 0.0
            %1168 = vmatprep.subr.mxu0 0.0
            %1169 = vmatpush1.msra.mxu0 0.0
            %1170 = vmatprep.subr.mxu0 0.0
            %1171 = vmatpush1.msra.mxu0 0.0
            %1172 = vmatprep.subr.mxu0 0.0
            %1173 = vmatpush1.msra.mxu0 0.0
            %1174 = vmatprep.subr.mxu0 0.0
            %1175 = vmatpush1.msra.mxu0 0.0
            %1176 = vmatprep.subr.mxu0 0.0
            %1177 = vmatpush1.msra.mxu0 0.0
            %1178 = vmatprep.subr.mxu0 0.0
            %1179 = vmatpush1.msra.mxu0 0.0
            %1180 = vmatprep.subr.mxu0 0.0
            %1181 = vmatpush1.msra.mxu0 0.0
            %1182 = vmatprep.subr.mxu0 0.0
            %1183 = vmatpush1.msra.mxu0 0.0
            %1184 = vmatprep.subr.mxu0 0.0
            %1185 = vmatpush1.msra.mxu0 0.0
            %1186 = vmatprep.subr.mxu0 0.0
            %1187 = vmatpush1.msra.mxu0 0.0
            %1188 = vmatprep.subr.mxu0 0.0
            %1189 = vmatpush1.msra.mxu0 0.0
            %1190 = vmatprep.mubr.f32.mxu0 0.0
            %1191 = vmatmul.mubr.f32.gmra.mrb[0].mxu0 %v848
            %v1192 = vpop.f32.mrb[0].mxu0
            %v1193 = vadd.f32 0.0, %v1192
            %v1194 = vpop.f32.mrb[0].mxu0
            %v1195 = vadd.f32 0.0, %v1194
            %1196 = vmatprep.mubr.f32.mxu0 0.0
            %1197 = vmatmul.mubr.f32.gmra.mrb[0].mxu0 %v851
            %v1198 = vpop.f32.mrb[0].mxu0
            %v1199 = vadd.f32 0.0, %v1198
            %v1200 = vpop.f32.mrb[0].mxu0
            %v1201 = vadd.f32 0.0, %v1200
            %1202 = vmatprep.mubr.f32.mxu0 0.0
            %1203 = vmatmul.mubr.f32.gmra.mrb[0].mxu0 %v854
            %v1204 = vpop.f32.mrb[0].mxu0
            %v1205 = vadd.f32 0.0, %v1204
            %v1206 = vpop.f32.mrb[0].mxu0
            %v1207 = vadd.f32 0.0, %v1206
            %1208 = vmatprep.mubr.f32.mxu0 0.0
            %1209 = vmatmul.mubr.f32.gmra.mrb[0].mxu0 %v857
            %v1210 = vpop.f32.mrb[0].mxu0
            %v1211 = vadd.f32 0.0, %v1210
            %v1212 = vpop.f32.mrb[0].mxu0
            %v1213 = vadd.f32 0.0, %v1212
            %1214 = vdwg.mxu0
            %v1215 = vmul.f32 %v926, %v814
            %v1216 = vmul.f32 %v928, %v815
            %v1217 = vmul.f32 %v1015, %v816
            %v1218 = vmul.f32 %v1017, %v817
            %v1219 = vmul.f32 %v1104, %v818
            %v1220 = vmul.f32 %v1106, %v819
            %v1221 = vmul.f32 %v1193, %v820
            %v1222 = vmul.f32 %v1195, %v821
            %v1223 = vmul.f32 %v932, %v822
            %v1224 = vmul.f32 %v934, %v823
            %v1225 = vmul.f32 %v1021, %v824
            %v1226 = vmul.f32 %v1023, %v825
            %v1227 = vmul.f32 %v1110, %v826
            %v1228 = vmul.f32 %v1112, %v827
            %v1229 = vmul.f32 %v1199, %v828
            %v1230 = vmul.f32 %v1201, %v829
            %v1231 = vmul.f32 %v938, %v830
            %v1232 = vmul.f32 %v940, %v831
            %v1233 = vmul.f32 %v1027, %v832
            %v1234 = vmul.f32 %v1029, %v833
            %v1235 = vmul.f32 %v1116, %v834
            %v1236 = vmul.f32 %v1118, %v835
            %v1237 = vmul.f32 %v1205, %v836
            %v1238 = vmul.f32 %v1207, %v837
            %v1239 = vmul.f32 %v944, %v838
            %v1240 = vmul.f32 %v946, %v839
            %v1241 = vmul.f32 %v1033, %v840
            %v1242 = vmul.f32 %v1035, %v841
            %v1243 = vmul.f32 %v1122, %v842
            %v1244 = vmul.f32 %v1124, %v843
            %v1245 = vmul.f32 %v1211, %v844
            %v1246 = vmul.f32 %v1213, %v845
            %v1247 = vadd.f32 %v1215, %v1223
            %v1248 = vadd.f32 %v1247, %v1231
            %v1249 = vadd.f32 %v1248, %v1239
            %v1250 = vrot.slane %v1249, 4
            %v1251 = vadd.f32 %v1249, %v1250
            %v1252 = vrot.slane %v1251, 2
            %v1253 = vadd.f32 %v1251, %v1252
            %v1254 = vrot.slane %v1253, 1
            %v1255 = vadd.f32 %v1253, %v1254
            %v1256 = vadd.f32 %v1216, %v1224
            %v1257 = vadd.f32 %v1256, %v1232
            %v1258 = vadd.f32 %v1257, %v1240
            %v1259 = vrot.slane %v1258, 4
            %v1260 = vadd.f32 %v1258, %v1259
            %v1261 = vrot.slane %v1260, 2
            %v1262 = vadd.f32 %v1260, %v1261
            %v1263 = vrot.slane %v1262, 1
            %v1264 = vadd.f32 %v1262, %v1263
            %v1265 = vadd.f32 %v1217, %v1225
            %v1266 = vadd.f32 %v1265, %v1233
            %v1267 = vadd.f32 %v1266, %v1241
            %v1268 = vrot.slane %v1267, 4
            %v1269 = vadd.f32 %v1267, %v1268
            %v1270 = vrot.slane %v1269, 2
            %v1271 = vadd.f32 %v1269, %v1270
            %v1272 = vrot.slane %v1271, 1
            %v1273 = vadd.f32 %v1271, %v1272
            %v1274 = vadd.f32 %v1218, %v1226
            %v1275 = vadd.f32 %v1274, %v1234
            %v1276 = vadd.f32 %v1275, %v1242
            %v1277 = vrot.slane %v1276, 4
            %v1278 = vadd.f32 %v1276, %v1277
            %v1279 = vrot.slane %v1278, 2
            %v1280 = vadd.f32 %v1278, %v1279
            %v1281 = vrot.slane %v1280, 1
            %v1282 = vadd.f32 %v1280, %v1281
            %v1283 = vadd.f32 %v1219, %v1227
            %v1284 = vadd.f32 %v1283, %v1235
            %v1285 = vadd.f32 %v1284, %v1243
            %v1286 = vrot.slane %v1285, 4
            %v1287 = vadd.f32 %v1285, %v1286
            %v1288 = vrot.slane %v1287, 2
            %v1289 = vadd.f32 %v1287, %v1288
            %v1290 = vrot.slane %v1289, 1
            %v1291 = vadd.f32 %v1289, %v1290
            %v1292 = vadd.f32 %v1220, %v1228
            %v1293 = vadd.f32 %v1292, %v1236
            %v1294 = vadd.f32 %v1293, %v1244
            %v1295 = vrot.slane %v1294, 4
            %v1296 = vadd.f32 %v1294, %v1295
            %v1297 = vrot.slane %v1296, 2
            %v1298 = vadd.f32 %v1296, %v1297
            %v1299 = vrot.slane %v1298, 1
            %v1300 = vadd.f32 %v1298, %v1299
            %v1301 = vadd.f32 %v1221, %v1229
            %v1302 = vadd.f32 %v1301, %v1237
            %v1303 = vadd.f32 %v1302, %v1245
            %v1304 = vrot.slane %v1303, 4
            %v1305 = vadd.f32 %v1303, %v1304
            %v1306 = vrot.slane %v1305, 2
            %v1307 = vadd.f32 %v1305, %v1306
            %v1308 = vrot.slane %v1307, 1
            %v1309 = vadd.f32 %v1307, %v1308
            %v1310 = vadd.f32 %v1222, %v1230
            %v1311 = vadd.f32 %v1310, %v1238
            %v1312 = vadd.f32 %v1311, %v1246
            %v1313 = vrot.slane %v1312, 4
            %v1314 = vadd.f32 %v1312, %v1313
            %v1315 = vrot.slane %v1314, 2
            %v1316 = vadd.f32 %v1314, %v1315
            %v1317 = vrot.slane %v1316, 1
            %v1318 = vadd.f32 %v1316, %v1317
            %v1319 = vadd.f32 %v459, %v1255
            %v1320 = vadd.f32 %v460, %v1264
            %v1321 = vadd.f32 %v461, %v1273
            %v1322 = vadd.f32 %v462, %v1282
            %v1323 = vadd.f32 %v463, %v1291
            %v1324 = vadd.f32 %v464, %v1300
            %v1325 = vadd.f32 %v465, %v1309
            %v1326 = vadd.f32 %v466, %v1318
          $region72: #{tpu_custom_call.1} parent=64 // loop_footer
            %s456 = sadd.s32 %s454, 1
          $region73: #{tpu_custom_call.1} parent=64 // loop_footer_branch
            %453 = sbr.rel target = $region69
          $region74: #{tpu_custom_call.1} parent=64 // loop_exit
            _
          %v1327 = vadd.f32 %v459, %v460
          %v1328 = vadd.f32 %v1327, %v461
          %v1329 = vadd.f32 %v1328, %v462
          %v1330 = vadd.f32 %v1329, %v463
          %v1331 = vadd.f32 %v1330, %v464
          %v1332 = vadd.f32 %v1331, %v465
          %v1333 = vadd.f32 %v1332, %v466
          %v1334 = vsub.f32 %v430, 1.0
          %v1335 = vstv %s324
          %v1336 = vmul.f32 %v1334, %v1335
          %v1337 = vadd.f32 %v425, %v1336
          %v1338 = vsub.f32 %v422, %v1337
          %vm1339 = vcmp.gt.f32.partialorder %v430, 0.0
          %v1340 = vsel %vm1339, %v437, -2.0
          %v1341 = vmul.f32 %v1334, %v447
          %v1342 = vadd.f32 %v437, %v1341
          %v1343 = vmul.f32 %v1334, %v450
          %v1344 = vadd.f32 %v444, %v1343
          %v1345 = vmul.f32 %v428, %v447
          %v1346 = vadd.f32 %v437, %v1345
          %v1347 = vmul.f32 %v428, %v450
          %v1348 = vadd.f32 %v444, %v1347
          %v1349 = vlaneseq
          %v1350 = vshrl.u32 %v1349, 7
          %v1351 = vsub.s32 0, %v1350
          %v1352 = vrot.slane %v1340, %v1351
          %v1353 = vlaneseq
          %v1354 = vshrl.u32 %v1353, 7
          %v1355 = vsub.s32 0, %v1354
          %v1356 = vrot.slane %v1342, %v1355
          %v1357 = vlaneseq
          %v1358 = vshrl.u32 %v1357, 7
          %v1359 = vsub.s32 0, %v1358
          %v1360 = vrot.slane %v1346, %v1359
          %v1361 = vsub.f32 %v343, %v1352
          %v1362 = vsub.f32 %v343, %v1356
          %v1363 = vsub.f32 %v343, %v1360
          %v1364 = vsub.f32 %v344, %v1352
          %v1365 = vsub.f32 %v344, %v1356
          %v1366 = vsub.f32 %v344, %v1360
          %v1367 = vsub.f32 %v345, %v1352
          %v1368 = vsub.f32 %v345, %v1356
          %v1369 = vsub.f32 %v345, %v1360
          %v1370 = vsub.f32 %v346, %v1352
          %v1371 = vsub.f32 %v346, %v1356
          %v1372 = vsub.f32 %v346, %v1360
          %v1373 = vand.u32 2147483647, %v1361
          %v1374 = vand.u32 2147483647, %v1362
          %v1375 = vand.u32 2147483647, %v1363
          %v1376 = vand.u32 2147483647, %v1364
          %v1377 = vand.u32 2147483647, %v1365
          %v1378 = vand.u32 2147483647, %v1366
          %v1379 = vand.u32 2147483647, %v1367
          %v1380 = vand.u32 2147483647, %v1368
          %v1381 = vand.u32 2147483647, %v1369
          %v1382 = vand.u32 2147483647, %v1370
          %v1383 = vand.u32 2147483647, %v1371
          %v1384 = vand.u32 2147483647, %v1372
          %v1385 = vsub.f32 1.0, %v1373
          %v1386 = vsub.f32 1.0, %v1374
          %v1387 = vsub.f32 1.0, %v1375
          %v1388 = vsub.f32 1.0, %v1376
          %v1389 = vsub.f32 1.0, %v1377
          %v1390 = vsub.f32 1.0, %v1378
          %v1391 = vsub.f32 1.0, %v1379
          %v1392 = vsub.f32 1.0, %v1380
          %v1393 = vsub.f32 1.0, %v1381
          %v1394 = vsub.f32 1.0, %v1382
          %v1395 = vsub.f32 1.0, %v1383
          %v1396 = vsub.f32 1.0, %v1384
          %v1397 = vmax.f32 %v1385, 0.0
          %v1398 = vmax.f32 %v1386, 0.0
          %v1399 = vmax.f32 %v1387, 0.0
          %v1400 = vmax.f32 %v1388, 0.0
          %v1401 = vmax.f32 %v1389, 0.0
          %v1402 = vmax.f32 %v1390, 0.0
          %v1403 = vmax.f32 %v1391, 0.0
          %v1404 = vmax.f32 %v1392, 0.0
          %v1405 = vmax.f32 %v1393, 0.0
          %v1406 = vmax.f32 %v1394, 0.0
          %v1407 = vmax.f32 %v1395, 0.0
          %v1408 = vmax.f32 %v1396, 0.0
          %v1409 = vlaneseq
          %v1410 = vshrl.u32 %v1409, 7
          %v1411 = vsub.s32 0, %v1410
          %v1412 = vrot.slane %v444, %v1411
          %v1413 = vlaneseq
          %v1414 = vshrl.u32 %v1413, 7
          %v1415 = vsub.s32 0, %v1414
          %v1416 = vrot.slane %v1344, %v1415
          %v1417 = vlaneseq
          %v1418 = vshrl.u32 %v1417, 7
          %v1419 = vsub.s32 0, %v1418
          %v1420 = vrot.slane %v1348, %v1419
          %v1421 = vsub.f32 %v343, %v1412
          %v1422 = vsub.f32 %v343, %v1416
          %v1423 = vsub.f32 %v343, %v1420
          %v1424 = vsub.f32 %v344, %v1412
          %v1425 = vsub.f32 %v344, %v1416
          %v1426 = vsub.f32 %v344, %v1420
          %v1427 = vsub.f32 %v345, %v1412
          %v1428 = vsub.f32 %v345, %v1416
          %v1429 = vsub.f32 %v345, %v1420
          %v1430 = vsub.f32 %v346, %v1412
          %v1431 = vsub.f32 %v346, %v1416
          %v1432 = vsub.f32 %v346, %v1420
          %v1433 = vand.u32 2147483647, %v1421
          %v1434 = vand.u32 2147483647, %v1422
          %v1435 = vand.u32 2147483647, %v1423
          %v1436 = vand.u32 2147483647, %v1424
          %v1437 = vand.u32 2147483647, %v1425
          %v1438 = vand.u32 2147483647, %v1426
          %v1439 = vand.u32 2147483647, %v1427
          %v1440 = vand.u32 2147483647, %v1428
          %v1441 = vand.u32 2147483647, %v1429
          %v1442 = vand.u32 2147483647, %v1430
          %v1443 = vand.u32 2147483647, %v1431
          %v1444 = vand.u32 2147483647, %v1432
          %v1445 = vsub.f32 1.0, %v1433
          %v1446 = vsub.f32 1.0, %v1434
          %v1447 = vsub.f32 1.0, %v1435
          %v1448 = vsub.f32 1.0, %v1436
          %v1449 = vsub.f32 1.0, %v1437
          %v1450 = vsub.f32 1.0, %v1438
          %v1451 = vsub.f32 1.0, %v1439
          %v1452 = vsub.f32 1.0, %v1440
          %v1453 = vsub.f32 1.0, %v1441
          %v1454 = vsub.f32 1.0, %v1442
          %v1455 = vsub.f32 1.0, %v1443
          %v1456 = vsub.f32 1.0, %v1444
          %v1457 = vmax.f32 %v1445, 0.0
          %v1458 = vmax.f32 %v1446, 0.0
          %v1459 = vmax.f32 %v1447, 0.0
          %v1460 = vmax.f32 %v1448, 0.0
          %v1461 = vmax.f32 %v1449, 0.0
          %v1462 = vmax.f32 %v1450, 0.0
          %v1463 = vmax.f32 %v1451, 0.0
          %v1464 = vmax.f32 %v1452, 0.0
          %v1465 = vmax.f32 %v1453, 0.0
          %v1466 = vmax.f32 %v1454, 0.0
          %v1467 = vmax.f32 %v1455, 0.0
          %v1468 = vmax.f32 %v1456, 0.0
          %vm1469 = vcmask 261120
          %v1471 = vsel %vm1469, %v334, 0
          %v1474 = vsel %vm1469, %v335, 0
          %v1477 = vsel %vm1469, %v336, 0
          %v1480 = vsel %vm1469, %v337, 0
          %1482 = vmatprep.subr.mxu0 %v1398
          %1483 = vmatpush1.msra.mxu0 %v1397
          %1484 = vmatprep.subr.mxu0 %v1401
          %1485 = vmatpush1.msra.mxu0 %v1400
          %1486 = vmatprep.subr.mxu0 %v1404
          %1487 = vmatpush1.msra.mxu0 %v1403
          %1488 = vmatprep.subr.mxu0 %v1407
          %1489 = vmatpush1.msra.mxu0 %v1406
          %1490 = vmatprep.subr.mxu0 0.0
          %1491 = vmatpush1.msra.mxu0 0.0
          %1492 = vmatprep.subr.mxu0 0.0
          %1493 = vmatpush1.msra.mxu0 0.0
          %1494 = vmatprep.subr.mxu0 0.0
          %1495 = vmatpush1.msra.mxu0 0.0
          %1496 = vmatprep.subr.mxu0 0.0
          %1497 = vmatpush1.msra.mxu0 0.0
          %1498 = vmatprep.subr.mxu0 0.0
          %1499 = vmatpush1.msra.mxu0 0.0
          %1500 = vmatprep.subr.mxu0 0.0
          %1501 = vmatpush1.msra.mxu0 0.0
          %1502 = vmatprep.subr.mxu0 0.0
          %1503 = vmatpush1.msra.mxu0 0.0
          %1504 = vmatprep.subr.mxu0 0.0
          %1505 = vmatpush1.msra.mxu0 0.0
          %1506 = vmatprep.subr.mxu0 0.0
          %1507 = vmatpush1.msra.mxu0 0.0
          %1508 = vmatprep.subr.mxu0 0.0
          %1509 = vmatpush1.msra.mxu0 0.0
          %1510 = vmatprep.subr.mxu0 0.0
          %1511 = vmatpush1.msra.mxu0 0.0
          %1512 = vmatprep.subr.mxu0 0.0
          %1513 = vmatpush1.msra.mxu0 0.0
          %1514 = vmatprep.subr.mxu0 0.0
          %1515 = vmatpush1.msra.mxu0 0.0
          %1516 = vmatprep.subr.mxu0 0.0
          %1517 = vmatpush1.msra.mxu0 0.0
          %1518 = vmatprep.subr.mxu0 0.0
          %1519 = vmatpush1.msra.mxu0 0.0
          %1520 = vmatprep.subr.mxu0 0.0
          %1521 = vmatpush1.msra.mxu0 0.0
          %1522 = vmatprep.subr.mxu0 0.0
          %1523 = vmatpush1.msra.mxu0 0.0
          %1524 = vmatprep.subr.mxu0 0.0
          %1525 = vmatpush1.msra.mxu0 0.0
          %1526 = vmatprep.subr.mxu0 0.0
          %1527 = vmatpush1.msra.mxu0 0.0
          %1528 = vmatprep.subr.mxu0 0.0
          %1529 = vmatpush1.msra.mxu0 0.0
          %1530 = vmatprep.subr.mxu0 0.0
          %1531 = vmatpush1.msra.mxu0 0.0
          %1532 = vmatprep.subr.mxu0 0.0
          %1533 = vmatpush1.msra.mxu0 0.0
          %1534 = vmatprep.subr.mxu0 0.0
          %1535 = vmatpush1.msra.mxu0 0.0
          %1536 = vmatprep.subr.mxu0 0.0
          %1537 = vmatpush1.msra.mxu0 0.0
          %1538 = vmatprep.subr.mxu0 0.0
          %1539 = vmatpush1.msra.mxu0 0.0
          %1540 = vmatprep.subr.mxu0 0.0
          %1541 = vmatpush1.msra.mxu0 0.0
          %1542 = vmatprep.subr.mxu0 0.0
          %1543 = vmatpush1.msra.mxu0 0.0
          %1544 = vmatprep.subr.mxu0 0.0
          %1545 = vmatpush1.msra.mxu0 0.0
          %1546 = vmatprep.mubr.f32.mxu0 0.0
          %1547 = vmatmul.mubr.f32.gmra.mrb[0].mxu0 %v1471
          %v1548 = vpop.f32.mrb[0].mxu0
          %v1549 = vadd.f32 0.0, %v1548
          %v1550 = vpop.f32.mrb[0].mxu0
          %v1551 = vadd.f32 0.0, %v1550
          %1552 = vmatprep.mubr.f32.mxu0 0.0
          %1553 = vmatmul.mubr.f32.gmra.mrb[0].mxu0 %v1474
          %v1554 = vpop.f32.mrb[0].mxu0
          %v1555 = vadd.f32 0.0, %v1554
          %v1556 = vpop.f32.mrb[0].mxu0
          %v1557 = vadd.f32 0.0, %v1556
          %1558 = vmatprep.mubr.f32.mxu0 0.0
          %1559 = vmatmul.mubr.f32.gmra.mrb[0].mxu0 %v1477
          %v1560 = vpop.f32.mrb[0].mxu0
          %v1561 = vadd.f32 0.0, %v1560
          %v1562 = vpop.f32.mrb[0].mxu0
          %v1563 = vadd.f32 0.0, %v1562
          %1564 = vmatprep.mubr.f32.mxu0 0.0
          %1565 = vmatmul.mubr.f32.gmra.mrb[0].mxu0 %v1480
          %v1566 = vpop.f32.mrb[0].mxu0
          %v1567 = vadd.f32 0.0, %v1566
          %v1568 = vpop.f32.mrb[0].mxu0
          %v1569 = vadd.f32 0.0, %v1568
          %1570 = vdwg.mxu0
          %1571 = vmatprep.subr.mxu0 0.0
          %1572 = vmatpush1.msra.mxu0 %v1399
          %1573 = vmatprep.subr.mxu0 0.0
          %1574 = vmatpush1.msra.mxu0 %v1402
          %1575 = vmatprep.subr.mxu0 0.0
          %1576 = vmatpush1.msra.mxu0 %v1405
          %1577 = vmatprep.subr.mxu0 0.0
          %1578 = vmatpush1.msra.mxu0 %v1408
          %1579 = vmatprep.subr.mxu0 0.0
          %1580 = vmatpush1.msra.mxu0 0.0
          %1581 = vmatprep.subr.mxu0 0.0
          %1582 = vmatpush1.msra.mxu0 0.0
          %1583 = vmatprep.subr.mxu0 0.0
          %1584 = vmatpush1.msra.mxu0 0.0
          %1585 = vmatprep.subr.mxu0 0.0
          %1586 = vmatpush1.msra.mxu0 0.0
          %1587 = vmatprep.subr.mxu0 0.0
          %1588 = vmatpush1.msra.mxu0 0.0
          %1589 = vmatprep.subr.mxu0 0.0
          %1590 = vmatpush1.msra.mxu0 0.0
          %1591 = vmatprep.subr.mxu0 0.0
          %1592 = vmatpush1.msra.mxu0 0.0
          %1593 = vmatprep.subr.mxu0 0.0
          %1594 = vmatpush1.msra.mxu0 0.0
          %1595 = vmatprep.subr.mxu0 0.0
          %1596 = vmatpush1.msra.mxu0 0.0
          %1597 = vmatprep.subr.mxu0 0.0
          %1598 = vmatpush1.msra.mxu0 0.0
          %1599 = vmatprep.subr.mxu0 0.0
          %1600 = vmatpush1.msra.mxu0 0.0
          %1601 = vmatprep.subr.mxu0 0.0
          %1602 = vmatpush1.msra.mxu0 0.0
          %1603 = vmatprep.subr.mxu0 0.0
          %1604 = vmatpush1.msra.mxu0 0.0
          %1605 = vmatprep.subr.mxu0 0.0
          %1606 = vmatpush1.msra.mxu0 0.0
          %1607 = vmatprep.subr.mxu0 0.0
          %1608 = vmatpush1.msra.mxu0 0.0
          %1609 = vmatprep.subr.mxu0 0.0
          %1610 = vmatpush1.msra.mxu0 0.0
          %1611 = vmatprep.subr.mxu0 0.0
          %1612 = vmatpush1.msra.mxu0 0.0
          %1613 = vmatprep.subr.mxu0 0.0
          %1614 = vmatpush1.msra.mxu0 0.0
          %1615 = vmatprep.subr.mxu0 0.0
          %1616 = vmatpush1.msra.mxu0 0.0
          %1617 = vmatprep.subr.mxu0 0.0
          %1618 = vmatpush1.msra.mxu0 0.0
          %1619 = vmatprep.subr.mxu0 0.0
          %1620 = vmatpush1.msra.mxu0 0.0
          %1621 = vmatprep.subr.mxu0 0.0
          %1622 = vmatpush1.msra.mxu0 0.0
          %1623 = vmatprep.subr.mxu0 0.0
          %1624 = vmatpush1.msra.mxu0 0.0
          %1625 = vmatprep.subr.mxu0 0.0
          %1626 = vmatpush1.msra.mxu0 0.0
          %1627 = vmatprep.subr.mxu0 0.0
          %1628 = vmatpush1.msra.mxu0 0.0
          %1629 = vmatprep.subr.mxu0 0.0
          %1630 = vmatpush1.msra.mxu0 0.0
          %1631 = vmatprep.subr.mxu0 0.0
          %1632 = vmatpush1.msra.mxu0 0.0
          %1633 = vmatprep.subr.mxu0 0.0
          %1634 = vmatpush1.msra.mxu0 0.0
          %1635 = vmatprep.mubr.f32.mxu0 0.0
          %1636 = vmatmul.mubr.f32.gmra.mrb[0].mxu0 %v1471
          %v1637 = vpop.f32.mrb[0].mxu0
          %v1638 = vadd.f32 0.0, %v1637
          %v1639 = vpop.f32.mrb[0].mxu0
          %1640 = vmatprep.mubr.f32.mxu0 0.0
          %1641 = vmatmul.mubr.f32.gmra.mrb[0].mxu0 %v1474
          %v1642 = vpop.f32.mrb[0].mxu0
          %v1643 = vadd.f32 0.0, %v1642
          %v1644 = vpop.f32.mrb[0].mxu0
          %1645 = vmatprep.mubr.f32.mxu0 0.0
          %1646 = vmatmul.mubr.f32.gmra.mrb[0].mxu0 %v1477
          %v1647 = vpop.f32.mrb[0].mxu0
          %v1648 = vadd.f32 0.0, %v1647
          %v1649 = vpop.f32.mrb[0].mxu0
          %1650 = vmatprep.mubr.f32.mxu0 0.0
          %1651 = vmatmul.mubr.f32.gmra.mrb[0].mxu0 %v1480
          %v1652 = vpop.f32.mrb[0].mxu0
          %v1653 = vadd.f32 0.0, %v1652
          %v1654 = vpop.f32.mrb[0].mxu0
          %1655 = vdwg.mxu0
          %v1656 = vmul.f32 %v1549, %v1457
          %v1657 = vmul.f32 %v1551, %v1458
          %v1658 = vmul.f32 %v1638, %v1459
          %v1659 = vmul.f32 %v1555, %v1460
          %v1660 = vmul.f32 %v1557, %v1461
          %v1661 = vmul.f32 %v1643, %v1462
          %v1662 = vmul.f32 %v1561, %v1463
          %v1663 = vmul.f32 %v1563, %v1464
          %v1664 = vmul.f32 %v1648, %v1465
          %v1665 = vmul.f32 %v1567, %v1466
          %v1666 = vmul.f32 %v1569, %v1467
          %v1667 = vmul.f32 %v1653, %v1468
          %v1668 = vadd.f32 %v1656, %v1659
          %v1669 = vadd.f32 %v1668, %v1662
          %v1670 = vadd.f32 %v1669, %v1665
          %v1671 = vrot.slane %v1670, 4
          %v1672 = vadd.f32 %v1670, %v1671
          %v1673 = vrot.slane %v1672, 2
          %v1674 = vadd.f32 %v1672, %v1673
          %v1675 = vrot.slane %v1674, 1
          %v1676 = vadd.f32 %v1674, %v1675
          %v1677 = vadd.f32 %v1657, %v1660
          %v1678 = vadd.f32 %v1677, %v1663
          %v1679 = vadd.f32 %v1678, %v1666
          %v1680 = vrot.slane %v1679, 4
          %v1681 = vadd.f32 %v1679, %v1680
          %v1682 = vrot.slane %v1681, 2
          %v1683 = vadd.f32 %v1681, %v1682
          %v1684 = vrot.slane %v1683, 1
          %v1685 = vadd.f32 %v1683, %v1684
          %v1686 = vadd.f32 %v1658, %v1661
          %v1687 = vadd.f32 %v1686, %v1664
          %v1688 = vadd.f32 %v1687, %v1667
          %v1689 = vrot.slane %v1688, 4
          %v1690 = vadd.f32 %v1688, %v1689
          %v1691 = vrot.slane %v1690, 2
          %v1692 = vadd.f32 %v1690, %v1691
          %v1693 = vrot.slane %v1692, 1
          %v1694 = vadd.f32 %v1692, %v1693
          %v1695 = vmul.f32 %v1676, 0.5
          %v1696 = vsub.f32 %v1333, %v1695
          %v1697 = vmul.f32 %v1696, %v1335
          %vm1698 = vcmp.gt.f32.partialorder %v1697, 0.0
          %v1699 = vsub.f32 %v1338, %v1335
          %v1700 = vmul.f32 %v1699, 0.5
          %v1701 = vmul.f32 %v1700, %v1685
          %v1702 = vmul.f32 %v1338, 0.5
          %v1703 = vmul.f32 %v1702, %v1694
          %v1704 = vadd.f32 %v1701, %v1703
          %v1705 = vsel %vm1698, %v1704, 0.0
          %v1706 = vadd.f32 %v1697, %v1705
          %v1707 = vstv %s318
          %v1708 = vmul.f32 %v393, %v1707
          %v1709 = vmul.f32 %v1708, %v1708
          %v1710 = vstv %s319
          %v1711 = vmul.f32 %v394, %v1710
          %v1712 = vmul.f32 %v1711, %v1711
          %v1713 = vadd.f32 %v1709, %v1712
          %v1714 = vrsqrt.pop %v1713
          %v1715 = vmul.f32 %v1713, %v1714
          %vm1716 = vcmp.eq.f32.partialorder %v1713, inf
          %v1717 = vsel %vm1716, %v1713, %v1715
          %vm1718 = vcmp.eq.f32.partialorder %v1713, 0.0
          %v1719 = vand.u32 %v1713, 2147483648
          %v1720 = vsel %vm1718, %v1719, %v1717
          %v1721 = vmul.f32 %v1706, %v1720
          %s1722 = scalar_lea.vmem %s315, %s368 [#allocation12]
          %1723 = vst [vmem:[%s1722] sm:$0x1] %v1721
        $region65: #{tpu_custom_call.1} parent=39 // loop_footer
          %s372 = sadd.s32 1, %s368
        $region66: #{tpu_custom_call.1} parent=39 // loop_footer_branch
          %367 = sbr.rel target = $region62
        $region67: #{tpu_custom_call.1} parent=39 // loop_exit
          _
        %s1724 = sand.u32 %s166, 1
        %s1725 = scalar_lea.sflag [#allocation4], %s1724
        %s1726 = sand.u32 %s166, 1
        %s1727 = smul.addr %s1726, 8
        %s1728 = scalar_lea.vmem [#allocation12], %s1727
        // Predicated region
        $region75: #{tpu_custom_call.1} parent=39 // pred_check
          %p1729 = pneg %p176
        $region76: #{tpu_custom_call.1} parent=39 // pred_check_branch
          %1731 = sbr.rel (%p1729) target = $region78
        $region77: #{tpu_custom_call.1} parent=39 // pred_region
          %s1733 = ssub.s32 128, 128
          %1734 = vsyncadd %s1725, %s1733
          %s1735 = sadd.s32 %s32, %s31
          %s1736 = sadd.s32 %s1735, %s30
          %s1737 = smul.addr %s1736, 128
          %s1738 = scalar_lea.hbm %s5, %s1737
          %s1740 = sshll.u32 %s1728, 4
          %s1741 = int_to_ptr.vmem [resolvable:$true] %s1740
          %1743 = dma.vmem_to_hbm [thread:$0]  %s1741, 128, %s1738, %s1725
        $region78: #{tpu_custom_call.1} parent=39 // pred_fallthru
          _
      $region40: #{tpu_custom_call.1} parent=5 // pred_fallthru
        _
      %p1744 = scmp.le.s32.totalorder 2, %s20
      // Predicated region
      $region79: #{tpu_custom_call.1} parent=5 // pred_check
        %p1745 = pneg %p1744
      $region80: #{tpu_custom_call.1} parent=5 // pred_check_branch
        %1747 = sbr.rel (%p1745) target = $region82
      $region81: #{tpu_custom_call.1} parent=5 // pred_region
        %s1748 = ssub.s32 %s20, 2
        // Predicated region
        $region83: #{tpu_custom_call.1} parent=81 // pred_check
          %p1749 = pneg %p182
        $region84: #{tpu_custom_call.1} parent=81 // pred_check_branch
          %1751 = sbr.rel (%p1749) target = $region86
        $region85: #{tpu_custom_call.1} parent=81 // pred_region
          %s1752 = sand.u32 %s167, 1
          %s1753 = scalar_lea.sflag [#allocation4], %s1752
          %s1754 = sand.u32 %s167, 1
          %s1755 = smul.addr %s1754, 8
          %s1756 = scalar_lea.vmem [#allocation12], %s1755
          %1757 = dma.done %s1753, 128
        $region86: #{tpu_custom_call.1} parent=81 // pred_fallthru
          _
      $region82: #{tpu_custom_call.1} parent=5 // pred_fallthru
        _
    $region6: #{tpu_custom_call.1} parent=1 // loop_footer
      %s24 = sadd.s32 1, %s20
    $region7: #{tpu_custom_call.1} parent=1 // loop_footer_branch
      %19 = sbr.rel target = $region3
    $region8: #{tpu_custom_call.1} parent=1 // loop_exit
      _
    %1758 = vsyncpa [#allocation3], 1
    %s1759 = scalar_lea.sflag [#allocation3], 1
    %1760 = vsyncpa %s1759, 1
    %1761 = vsyncpa [#allocation4], 1
    %s1762 = scalar_lea.sflag [#allocation4], 1
    %1763 = vsyncpa %s1762, 1
    %1764 = vsyncpa [#allocation5], 1
    %s1765 = scalar_lea.sflag [#allocation5], 1
    %1766 = vsyncpa %s1765, 1
    %1767 = vsyncpa [#allocation6], 1
    %s1768 = scalar_lea.sflag [#allocation6], 1
    %1769 = vsyncpa %s1768, 1
    %1770 = vsyncpa [#allocation9], 1

</llo_original>
